<compile_context>
chip_gen: v6e
topology: v6e:2x2x1
jax: 0.10.0
libtpu: 0.0.40
codegen_flags: <defaults>
</compile_context>

<pallas_src>
import functools

import jax
import jax.numpy as jnp
from jax import lax
from jax.experimental import pallas as pl
from jax.experimental.pallas import tpu as pltpu


def _round_up(x, m):
    return ((x + m - 1) // m) * m


# ----------------------------------------------------------------------------
# Generic tiled matmul + bias kernel:  out = x @ w + b   (f32 accumulate)
# w and b arrive pre-padded so the N dim is a multiple of 128 (lane dense).
# ----------------------------------------------------------------------------
def _matmul_bias_kernel(x_ref, w_ref, b_ref, o_ref):
    o_ref[...] = (
        jnp.dot(x_ref[...], w_ref[...], preferred_element_type=jnp.float32)
        + b_ref[...]
    ).astype(o_ref.dtype)


def _matmul_bias(x, w, b, *, tm=256, tn_max=512, n_outer=False):
    """x: (M, K).  w: (K, Np) pre-padded, Np % 128 == 0.  b: (Np,) f32.
    Returns (M, Np) f32.  x is cast to w.dtype (bf16 compute, f32 accumulate).
    n_outer=True puts the N tiles on the outer grid axis so the weight is
    streamed from HBM exactly once (use for the big vocab projection)."""
    M, K = x.shape
    Np = w.shape[1]
    assert Np % 128 == 0

    # tile over N: largest multiple of 128 that divides Np, capped at tn_max
    tn = 128
    for cand in range((tn_max // 128) * 128, 127, -128):
        if Np % cand == 0:
            tn = cand
            break
    tm = min(tm, _round_up(M, 16))
    Mp = _round_up(M, tm)

    x_p = jnp.pad(x, ((0, Mp - M), (0, 0))) if Mp != M else x
    x_p = x_p.astype(w.dtype)          # bf16 operands, f32 accumulation
    b2 = b.astype(jnp.float32)[None, :]

    if n_outer:
        grid = (Np // tn, Mp // tm)
        x_map = lambda j, i: (i, 0)
        w_map = lambda j, i: (0, j)    # invariant across inner axis -> 1 HBM pass
        b_map = lambda j, i: (0, j)
        o_map = lambda j, i: (i, j)
    else:
        grid = (Mp // tm, Np // tn)
        x_map = lambda i, j: (i, 0)
        w_map = lambda i, j: (0, j)
        b_map = lambda i, j: (0, j)
        o_map = lambda i, j: (i, j)

    out = pl.pallas_call(
        _matmul_bias_kernel,
        out_shape=jax.ShapeDtypeStruct((Mp, Np), jnp.float32),
        grid=grid,
        in_specs=[
            pl.BlockSpec((tm, K), x_map),
            pl.BlockSpec((K, tn), w_map),
            pl.BlockSpec((1, tn), b_map),
        ],
        out_specs=pl.BlockSpec((tm, tn), o_map),
        compiler_params=pltpu.CompilerParams(
            dimension_semantics=("parallel", "parallel")),
    )(x_p, w, b2)
    return out[:M]


# ----------------------------------------------------------------------------
# GRU recurrence kernel (chunked over time).
#   gi_ref : (Tc, B, 3*Hp)  precomputed x @ W_ih_cat + fused biases, per-gate
#                           lane-aligned (gate g lives at [g*Hp, g*Hp+H))
#   h0_ref : (B, Hp)        initial hidden, zero-padded lanes
#   whh_ref: (Hp, 3*Hp)     fused hidden->gate weights (f32), zero-padded
#   bhn_ref: (1, Hp)        b_hn (must stay inside the r * (...) term)
#   hid_ref: (Tc, B, Hp)    per-chunk hidden outputs (lane-dense writeback)
#   h_sc   : (B, Hp)        VMEM scratch carrying h across grid steps
# Grid = (T/Tc,), "arbitrary" (sequential recurrence).
# Padded lanes stay exactly 0: gi/gh/bhn pad = 0 -> n_pad = 0, z_pad = 0.5,
# h_pad' = 0.5*h_pad, and h0 pad = 0.
# ----------------------------------------------------------------------------
def _gru_chunk_kernel(gi_ref, h0_ref, whh_ref, bhn_ref, hid_ref, h_sc, *, hp, tc):
    @pl.when(pl.program_id(0) == 0)
    def _():
        h_sc[...] = h0_ref[...]

    whh = whh_ref[...]
    bhn = bhn_ref[...]

    def step(t, h):
        gi = gi_ref[t]                                            # (B, 3*Hp)
        # single fused hidden->gates matmul on the serial critical path
        gh = jnp.dot(h, whh, preferred_element_type=jnp.float32)  # (B, 3*Hp)
        r = jax.nn.sigmoid(gi[:, 0:hp] + gh[:, 0:hp])
        z = jax.nn.sigmoid(gi[:, hp:2 * hp] + gh[:, hp:2 * hp])
        n = jnp.tanh(gi[:, 2 * hp:3 * hp] + r * (gh[:, 2 * hp:3 * hp] + bhn))
        h_new = (1.0 - z) * n + z * h
        hid_ref[t] = h_new.astype(hid_ref.dtype)
        return h_new

    h_final = lax.fori_loop(0, tc, step, h_sc[...], unroll=True)
    h_sc[...] = h_final


# ----------------------------------------------------------------------------
# One-time parameter preparation (outside the jitted hot path): gate fusion,
# lane-aligned padding, bf16 casts of the big matmul weights.
# PyTorch gate order: r, z, n.
# ----------------------------------------------------------------------------
def prepare_params(params, compute_dtype=jnp.bfloat16):
    H = params["w_hh"].shape[1]
    V = params["w_out"].shape[0]
    Hp = _round_up(H, 128)
    Vp = _round_up(V, 128)
    GIp = 3 * Hp

    w_ih, w_hh = params["w_ih"], params["w_hh"]      # (3H, H)
    b_ih, b_hh = params["b_ih"], params["b_hh"]      # (3H,)

    w_ih_cat = jnp.zeros((H, GIp), jnp.float32)      # per-gate lane-aligned
    w_hh_cat = jnp.zeros((Hp, GIp), jnp.float32)
    for g in range(3):
        w_ih_cat = w_ih_cat.at[:, g * Hp:g * Hp + H].set(w_ih[g * H:(g + 1) * H, :].T)
        w_hh_cat = w_hh_cat.at[:H, g * Hp:g * Hp + H].set(w_hh[g * H:(g + 1) * H, :].T)

    # r/z hidden biases fold into the input-side projection; b_in stays on the
    # input side, b_hn must remain inside the r*(...) term.
    b_i = jnp.zeros((GIp,), jnp.float32)
    b_i = b_i.at[0 * Hp:0 * Hp + H].set(b_ih[0:H] + b_hh[0:H])
    b_i = b_i.at[1 * Hp:1 * Hp + H].set(b_ih[H:2 * H] + b_hh[H:2 * H])
    b_i = b_i.at[2 * Hp:2 * Hp + H].set(b_ih[2 * H:3 * H])
    b_hn = jnp.zeros((1, Hp), jnp.float32).at[0, :H].set(b_hh[2 * H:3 * H])

    w_out_p = jnp.zeros((Hp, Vp), jnp.float32).at[:H, :V].set(params["w_out"].T)
    b_out_p = jnp.zeros((Vp,), jnp.float32).at[:V].set(params["b_out"])

    return {
        "H": H, "Hp": Hp, "V": V, "Vp": Vp, "GIp": GIp,
        "embed": params["embed"].astype(compute_dtype),
        "w_ih_cat": w_ih_cat.astype(compute_dtype),   # bf16 MXU operand
        "b_i": b_i,                                   # f32 bias
        "w_hh_cat": w_hh_cat,                         # f32: serial path, keeps carry precision
        "b_hn": b_hn,
        "w_out": w_out_p.astype(compute_dtype),       # bf16 MXU operand
        "b_out": b_out_p,
    }


# ----------------------------------------------------------------------------
# Forward pass
# ----------------------------------------------------------------------------
def act_rnn_decoder_forward(states, sentences, prep, *, time_chunk=16):
    """states: (B, H) f32 initial hidden.  sentences: (B, T) int32 token ids.
    Returns logits (B, T, V) f32."""
    B, H = states.shape
    T = sentences.shape[1]
    Hp, Vp, GIp, V = prep["Hp"], prep["Vp"], prep["GIp"], prep["V"]

    Tc = max(1, min(time_chunk, T))
    Tp = _round_up(T, Tc)

    # --- time-major embedding gather (no extra (B,T,H) transpose) ------------
    embs_tm = jnp.take(prep["embed"], sentences.T, axis=0)       # (T, B, H) bf16
    if Tp != T:
        embs_tm = jnp.pad(embs_tm, ((0, Tp - T), (0, 0), (0, 0)))

    # --- input-gate projection hoisted out of the loop: one big bf16 matmul --
    gi = _matmul_bias(embs_tm.reshape(Tp * B, H), prep["w_ih_cat"], prep["b_i"],
                      tm=256, tn_max=512)                        # (Tp*B, GIp) f32
    gi = gi.reshape(Tp, B, GIp)

    # --- initial hidden, zero-padded to lane width ----------------------------
    h0 = jnp.zeros((B, Hp), jnp.float32).at[:, :H].set(states.astype(jnp.float32))

    # --- GRU recurrence: time-chunked grid, h carried in VMEM scratch --------
    hid = pl.pallas_call(
        functools.partial(_gru_chunk_kernel, hp=Hp, tc=Tc),
        out_shape=jax.ShapeDtypeStruct((Tp, B, Hp), jnp.float32),
        grid=(Tp // Tc,),
        in_specs=[
            pl.BlockSpec((Tc, B, GIp), lambda c: (c, 0, 0)),
            pl.BlockSpec((B, Hp), lambda c: (0, 0)),
            pl.BlockSpec((Hp, GIp), lambda c: (0, 0)),
            pl.BlockSpec((1, Hp), lambda c: (0, 0)),
        ],
        out_specs=pl.BlockSpec((Tc, B, Hp), lambda c: (c, 0, 0)),
        scratch_shapes=[pltpu.VMEM((B, Hp), jnp.float32)],
        compiler_params=pltpu.CompilerParams(
            dimension_semantics=("arbitrary",)),
    )(gi, h0, prep["w_hh_cat"], prep["b_hn"])

    # --- transpose the SMALL hidden tensor (not the huge logits) -------------
    hid_bt = jnp.transpose(hid[:T], (1, 0, 2)).reshape(B * T, Hp)

    # --- vocab projection: N-outer grid so w_out streams from HBM once -------
    logits = _matmul_bias(hid_bt, prep["w_out"], prep["b_out"],
                          tm=512, tn_max=512, n_outer=True)      # (B*T, Vp) f32
    return logits[:, :V].reshape(B, T, V)


# ----------------------------------------------------------------------------
# Pure-JAX f32 reference (mirrors torch.nn.GRU / Embedding / Linear)
# ----------------------------------------------------------------------------
def _reference(states, sentences, params):
    H = states.shape[1]
    embs = jnp.take(params["embed"], sentences, axis=0)  # (B, T, H)
    w_ih, w_hh = params["w_ih"], params["w_hh"]
    b_ih, b_hh = params["b_ih"], params["b_hh"]

    def cell(h, x):
        gi = x @ w_ih.T + b_ih
        gh = h @ w_hh.T + b_hh
        r = jax.nn.sigmoid(gi[:, :H] + gh[:, :H])
        z = jax.nn.sigmoid(gi[:, H:2 * H] + gh[:, H:2 * H])
        n = jnp.tanh(gi[:, 2 * H:] + r * gh[:, 2 * H:])
        h_new = (1.0 - z) * n + z * h
        return h_new, h_new

    _, hs = lax.scan(cell, states, jnp.transpose(embs, (1, 0, 2)))
    hs = jnp.transpose(hs, (1, 0, 2))                    # (B, T, H)
    return hs @ params["w_out"].T + params["b_out"]      # (B, T, V)


# ----------------------------------------------------------------------------
# Deterministic parameter construction (shapes implied by the module __init__)
# ----------------------------------------------------------------------------
def make_params(key, vocab_size, hidden, pad_idx=0):
    ks = jax.random.split(key, 7)
    scale = 0.1
    embed = scale * jax.random.normal(ks[0], (vocab_size, hidden), jnp.float32)
    embed = embed.at[pad_idx].set(0.0)  # padding_idx row is zero
    return {
        "embed": embed,
        "w_ih": scale * jax.random.normal(ks[1], (3 * hidden, hidden), jnp.float32),
        "w_hh": scale * jax.random.normal(ks[2], (3 * hidden, hidden), jnp.float32),
        "b_ih": scale * jax.random.normal(ks[3], (3 * hidden,), jnp.float32),
        "b_hh": scale * jax.random.normal(ks[4], (3 * hidden,), jnp.float32),
        "w_out": scale * jax.random.normal(ks[5], (vocab_size, hidden), jnp.float32),
        "b_out": scale * jax.random.normal(ks[6], (vocab_size,), jnp.float32),
    }


if __name__ == "__main__":
    B, T, H, V = 8, 8, 32, 64
    key = jax.random.PRNGKey(0)
    k_par, k_state, k_sent = jax.random.split(key, 3)

    params = make_params(k_par, V, H, pad_idx=0)
    states = jax.random.normal(k_state, (B, H), jnp.float32)         # initial hidden
    sentences = jax.random.randint(k_sent, (B, T), 0, V, jnp.int32)  # token ids

    prep = prepare_params(params)          # one-time weight fusion/pad/bf16 cast
    fwd = jax.jit(functools.partial(act_rnn_decoder_forward, prep=prep))
    logits = fwd(states, sentences)
    jax.block_until_ready(logits)

    ref = _reference(states, sentences, params)
    assert logits.shape == (B, T, V)
    # bf16 MXU operands on the two big projections -> compare at bf16 tolerance.
    max_err = float(jnp.max(jnp.abs(logits - ref)))
    assert jnp.allclose(logits, ref, atol=2e-2, rtol=2e-2), (
        f"mismatch vs reference, max abs err {max_err}")

    print("KERNEL_OK")
</pallas_src>

<mosaic_0001>
module attributes {stable_mosaic.version = 11 : i64} {
  func.func @_matmul_bias_kernel(%arg0: i32, %arg1: i32, %arg2: memref<64x128xbf16, #tpu.memory_space<vmem>>, %arg3: memref<128x128xbf16, #tpu.memory_space<vmem>>, %arg4: memref<1x128xf32, #tpu.memory_space<vmem>>, %arg5: memref<64x128xf32, #tpu.memory_space<vmem>>) attributes {dimension_semantics = [#tpu.dimension_semantics<parallel>, #tpu.dimension_semantics<parallel>], iteration_bounds = array<i64: 1, 1>, scalar_prefetch = 0 : i64, scratch_operands = 0 : i64, tpu.core_type = #tpu.core_type<tc>, window_params = [{transform_indices = @transform_0, window_bounds = array<i64: 64, 128>}, {transform_indices = @transform_1, window_bounds = array<i64: 128, 128>}, {transform_indices = @transform_2, window_bounds = array<i64: 1, 128>}, {transform_indices = @transform_3, window_bounds = array<i64: 64, 128>}]} {
    %c0 = arith.constant 0 : index
    %c0_0 = arith.constant 0 : index
    %0 = vector.load %arg2[%c0, %c0_0] : memref<64x128xbf16, #tpu.memory_space<vmem>>, vector<64x128xbf16>
    %c0_1 = arith.constant 0 : index
    %c0_2 = arith.constant 0 : index
    %1 = vector.load %arg3[%c0_1, %c0_2] : memref<128x128xbf16, #tpu.memory_space<vmem>>, vector<128x128xbf16>
    %cst = arith.constant dense<0.000000e+00> : vector<64x128xf32>
    %2 = tpu.matmul %0, %1, %cst {dimension_numbers = #tpu.dot_dimension_numbers<[1], [0], [0], [1], [0, 0, 1, 1], [], []>} : vector<64x128xbf16>, vector<128x128xbf16>, vector<64x128xf32> -> vector<64x128xf32>
    %c0_3 = arith.constant 0 : index
    %c0_4 = arith.constant 0 : index
    %3 = vector.load %arg4[%c0_3, %c0_4] : memref<1x128xf32, #tpu.memory_space<vmem>>, vector<1x128xf32>
    %4 = vector.broadcast %3 : vector<1x128xf32> to vector<64x128xf32>
    %5 = arith.addf %2, %4 : vector<64x128xf32>
    %c0_5 = arith.constant 0 : index
    %c0_6 = arith.constant 0 : index
    %6 = vector.load %arg5[%c0_5, %c0_6] : memref<64x128xf32, #tpu.memory_space<vmem>>, vector<64x128xf32>
    tpu.vector_store %arg5[%c0_5, %c0_6], %5 {strides = array<i32>} : memref<64x128xf32, #tpu.memory_space<vmem>>, vector<64x128xf32>,
    return
  }
  func.func @transform_0(%arg0: i32, %arg1: i32) -> (i32, i32) {
    %c0_i32 = arith.constant 0 : i32
    %c0_i32_0 = arith.constant 0 : i32
    return %arg1, %c0_i32 : i32, i32
  }
  func.func @transform_1(%arg0: i32, %arg1: i32) -> (i32, i32) {
    %c0_i32 = arith.constant 0 : i32
    %c0_i32_0 = arith.constant 0 : i32
    return %c0_i32, %arg0 : i32, i32
  }
  func.func @transform_2(%arg0: i32, %arg1: i32) -> (i32, i32) {
    %c0_i32 = arith.constant 0 : i32
    %c0_i32_0 = arith.constant 0 : i32
    return %c0_i32, %arg0 : i32, i32
  }
  func.func @transform_3(%arg0: i32, %arg1: i32) -> (i32, i32) {
    %c0_i32 = arith.constant 0 : i32
    return %arg1, %arg0 : i32, i32
  }
}

module attributes {stable_mosaic.version = 11 : i64} {
  func.func @_matmul_bias_kernel(%arg0: i32, %arg1: i32, %arg2: memref<64x32xbf16, #tpu.memory_space<vmem>>, %arg3: memref<32x384xbf16, #tpu.memory_space<vmem>>, %arg4: memref<1x384xf32, #tpu.memory_space<vmem>>, %arg5: memref<64x384xf32, #tpu.memory_space<vmem>>) attributes {dimension_semantics = [#tpu.dimension_semantics<parallel>, #tpu.dimension_semantics<parallel>], iteration_bounds = array<i64: 1, 1>, scalar_prefetch = 0 : i64, scratch_operands = 0 : i64, tpu.core_type = #tpu.core_type<tc>, window_params = [{transform_indices = @transform_0, window_bounds = array<i64: 64, 32>}, {transform_indices = @transform_1, window_bounds = array<i64: 32, 384>}, {transform_indices = @transform_2, window_bounds = array<i64: 1, 384>}, {transform_indices = @transform_3, window_bounds = array<i64: 64, 384>}]} {
    %c0 = arith.constant 0 : index
    %c0_0 = arith.constant 0 : index
    %0 = vector.load %arg2[%c0, %c0_0] : memref<64x32xbf16, #tpu.memory_space<vmem>>, vector<64x32xbf16>
    %c0_1 = arith.constant 0 : index
    %c0_2 = arith.constant 0 : index
    %1 = vector.load %arg3[%c0_1, %c0_2] : memref<32x384xbf16, #tpu.memory_space<vmem>>, vector<32x384xbf16>
    %cst = arith.constant dense<0.000000e+00> : vector<64x384xf32>
    %2 = tpu.matmul %0, %1, %cst {dimension_numbers = #tpu.dot_dimension_numbers<[1], [0], [0], [1], [0, 0, 1, 1], [], []>} : vector<64x32xbf16>, vector<32x384xbf16>, vector<64x384xf32> -> vector<64x384xf32>
    %c0_3 = arith.constant 0 : index
    %c0_4 = arith.constant 0 : index
    %3 = vector.load %arg4[%c0_3, %c0_4] : memref<1x384xf32, #tpu.memory_space<vmem>>, vector<1x384xf32>
    %4 = vector.broadcast %3 : vector<1x384xf32> to vector<64x384xf32>
    %5 = arith.addf %2, %4 : vector<64x384xf32>
    %c0_5 = arith.constant 0 : index
    %c0_6 = arith.constant 0 : index
    %6 = vector.load %arg5[%c0_5, %c0_6] : memref<64x384xf32, #tpu.memory_space<vmem>>, vector<64x384xf32>
    tpu.vector_store %arg5[%c0_5, %c0_6], %5 {strides = array<i32>} : memref<64x384xf32, #tpu.memory_space<vmem>>, vector<64x384xf32>,
    return
  }
  func.func @transform_0(%arg0: i32, %arg1: i32) -> (i32, i32) {
    %c0_i32 = arith.constant 0 : i32
    %c0_i32_0 = arith.constant 0 : i32
    return %arg0, %c0_i32 : i32, i32
  }
  func.func @transform_1(%arg0: i32, %arg1: i32) -> (i32, i32) {
    %c0_i32 = arith.constant 0 : i32
    %c0_i32_0 = arith.constant 0 : i32
    return %c0_i32, %arg1 : i32, i32
  }
  func.func @transform_2(%arg0: i32, %arg1: i32) -> (i32, i32) {
    %c0_i32 = arith.constant 0 : i32
    %c0_i32_0 = arith.constant 0 : i32
    return %c0_i32, %arg1 : i32, i32
  }
  func.func @transform_3(%arg0: i32, %arg1: i32) -> (i32, i32) {
    %c0_i32 = arith.constant 0 : i32
    return %arg0, %arg1 : i32, i32
  }
}

module attributes {stable_mosaic.version = 11 : i64} {
  func.func @_gru_chunk_kernel(%arg0: i32, %arg1: memref<8x8x384xf32, #tpu.memory_space<vmem>>, %arg2: memref<8x128xf32, #tpu.memory_space<vmem>>, %arg3: memref<128x384xf32, #tpu.memory_space<vmem>>, %arg4: memref<1x128xf32, #tpu.memory_space<vmem>>, %arg5: memref<8x8x128xf32, #tpu.memory_space<vmem>>, %arg6: memref<8x128xf32, #tpu.memory_space<vmem>>) attributes {dimension_semantics = [#tpu.dimension_semantics<arbitrary>], iteration_bounds = array<i64: 1>, scalar_prefetch = 0 : i64, scratch_operands = 1 : i64, tpu.core_type = #tpu.core_type<tc>, window_params = [{transform_indices = @transform_0, window_bounds = array<i64: 8, 8, 384>}, {pipeline_mode = #tpu.pipeline_mode<synchronous>, transform_indices = @transform_1, window_bounds = array<i64: 8, 128>}, {pipeline_mode = #tpu.pipeline_mode<synchronous>, transform_indices = @transform_2, window_bounds = array<i64: 128, 384>}, {pipeline_mode = #tpu.pipeline_mode<synchronous>, transform_indices = @transform_3, window_bounds = array<i64: 1, 128>}, {transform_indices = @transform_4, window_bounds = array<i64: 8, 8, 128>}]} {
    %c0_i32 = arith.constant 0 : i32
    %0 = arith.cmpi eq, %arg0, %c0_i32 : i32
    %1 = arith.extui %0 : i1 to i32
    %c0_i32_0 = arith.constant 0 : i32
    %2 = arith.cmpi ne, %1, %c0_i32_0 : i32
    scf.if %2 {
      %c0_72 = arith.constant 0 : index
      %c0_73 = arith.constant 0 : index
      %295 = vector.load %arg2[%c0_72, %c0_73] : memref<8x128xf32, #tpu.memory_space<vmem>>, vector<8x128xf32>
      %c0_74 = arith.constant 0 : index
      %c0_75 = arith.constant 0 : index
      %296 = vector.load %arg6[%c0_74, %c0_75] : memref<8x128xf32, #tpu.memory_space<vmem>>, vector<8x128xf32>
      tpu.vector_store %arg6[%c0_74, %c0_75], %295 {strides = array<i32>} : memref<8x128xf32, #tpu.memory_space<vmem>>, vector<8x128xf32>,
    } else {
    }
    %c0 = arith.constant 0 : index
    %c0_1 = arith.constant 0 : index
    %3 = vector.load %arg3[%c0, %c0_1] : memref<128x384xf32, #tpu.memory_space<vmem>>, vector<128x384xf32>
    %c0_2 = arith.constant 0 : index
    %c0_3 = arith.constant 0 : index
    %4 = vector.load %arg4[%c0_2, %c0_3] : memref<1x128xf32, #tpu.memory_space<vmem>>, vector<1x128xf32>
    %c0_4 = arith.constant 0 : index
    %c0_5 = arith.constant 0 : index
    %5 = vector.load %arg6[%c0_4, %c0_5] : memref<8x128xf32, #tpu.memory_space<vmem>>, vector<8x128xf32>
    %c0_i32_6 = arith.constant 0 : i32
    %6 = arith.index_cast %c0_i32_6 : i32 to index
    %c0_7 = arith.constant 0 : index
    %c0_8 = arith.constant 0 : index
    %7 = vector.load %arg1[%6, %c0_7, %c0_8] : memref<8x8x384xf32, #tpu.memory_space<vmem>>, vector<1x8x384xf32>
    %8 = vector.shape_cast %7 : vector<1x8x384xf32> to vector<8x384xf32>
    %cst = arith.constant dense<0.000000e+00> : vector<8x384xf32>
    %9 = tpu.matmul %5, %3, %cst {dimension_numbers = #tpu.dot_dimension_numbers<[1], [0], [0], [1], [0, 0, 1, 1], [], []>} : vector<8x128xf32>, vector<128x384xf32>, vector<8x384xf32> -> vector<8x384xf32>
    %10 = vector.extract_strided_slice %8 {offsets = [0, 0], sizes = [8, 128], strides = [1, 1]} : vector<8x384xf32> to vector<8x128xf32>
    %11 = vector.extract_strided_slice %9 {offsets = [0, 0], sizes = [8, 128], strides = [1, 1]} : vector<8x384xf32> to vector<8x128xf32>
    %12 = arith.addf %10, %11 : vector<8x128xf32>
    %13 = arith.negf %12 : vector<8x128xf32>
    %14 = math.exp %13 : vector<8x128xf32>
    %cst_9 = arith.constant 1.000000e+00 : f32
    %15 = vector.broadcast %cst_9 : f32 to vector<8x128xf32>
    %16 = arith.addf %15, %14 : vector<8x128xf32>
    %17 = arith.divf %15, %16 : vector<8x128xf32>
    %18 = vector.extract_strided_slice %8 {offsets = [0, 128], sizes = [8, 128], strides = [1, 1]} : vector<8x384xf32> to vector<8x128xf32>
    %19 = vector.extract_strided_slice %9 {offsets = [0, 128], sizes = [8, 128], strides = [1, 1]} : vector<8x384xf32> to vector<8x128xf32>
    %20 = arith.addf %18, %19 : vector<8x128xf32>
    %21 = arith.negf %20 : vector<8x128xf32>
    %22 = math.exp %21 : vector<8x128xf32>
    %cst_10 = arith.constant 1.000000e+00 : f32
    %23 = vector.broadcast %cst_10 : f32 to vector<8x128xf32>
    %24 = arith.addf %23, %22 : vector<8x128xf32>
    %25 = arith.divf %23, %24 : vector<8x128xf32>
    %26 = vector.extract_strided_slice %8 {offsets = [0, 256], sizes = [8, 128], strides = [1, 1]} : vector<8x384xf32> to vector<8x128xf32>
    %27 = vector.extract_strided_slice %9 {offsets = [0, 256], sizes = [8, 128], strides = [1, 1]} : vector<8x384xf32> to vector<8x128xf32>
    %28 = vector.broadcast %4 : vector<1x128xf32> to vector<8x128xf32>
    %29 = arith.addf %27, %28 : vector<8x128xf32>
    %30 = arith.mulf %17, %29 : vector<8x128xf32>
    %31 = arith.addf %26, %30 : vector<8x128xf32>
    %32 = math.tanh %31 : vector<8x128xf32>
    %cst_11 = arith.constant 1.000000e+00 : f32
    %33 = vector.broadcast %cst_11 : f32 to vector<8x128xf32>
    %34 = arith.subf %33, %25 : vector<8x128xf32>
    %35 = arith.mulf %34, %32 : vector<8x128xf32>
    %36 = arith.mulf %25, %5 : vector<8x128xf32>
    %37 = arith.addf %35, %36 : vector<8x128xf32>
    %38 = arith.index_cast %c0_i32_6 : i32 to index
    %c0_12 = arith.constant 0 : index
    %c0_13 = arith.constant 0 : index
    %39 = vector.load %arg5[%38, %c0_12, %c0_13] : memref<8x8x128xf32, #tpu.memory_space<vmem>>, vector<1x8x128xf32>
    %40 = vector.shape_cast %39 : vector<1x8x128xf32> to vector<8x128xf32>
    %41 = vector.shape_cast %37 : vector<8x128xf32> to vector<1x8x128xf32>
    tpu.vector_store %arg5[%38, %c0_12, %c0_13], %41 {strides = array<i32>} : memref<8x8x128xf32, #tpu.memory_space<vmem>>, vector<1x8x128xf32>,
    %c1_i32 = arith.constant 1 : i32
    %42 = arith.index_cast %c1_i32 : i32 to index
    %c0_14 = arith.constant 0 : index
    %c0_15 = arith.constant 0 : index
    %43 = vector.load %arg1[%42, %c0_14, %c0_15] : memref<8x8x384xf32, #tpu.memory_space<vmem>>, vector<1x8x384xf32>
    %44 = vector.shape_cast %43 : vector<1x8x384xf32> to vector<8x384xf32>
    %cst_16 = arith.constant dense<0.000000e+00> : vector<8x384xf32>
    %45 = tpu.matmul %37, %3, %cst_16 {dimension_numbers = #tpu.dot_dimension_numbers<[1], [0], [0], [1], [0, 0, 1, 1], [], []>} : vector<8x128xf32>, vector<128x384xf32>, vector<8x384xf32> -> vector<8x384xf32>
    %46 = vector.extract_strided_slice %44 {offsets = [0, 0], sizes = [8, 128], strides = [1, 1]} : vector<8x384xf32> to vector<8x128xf32>
    %47 = vector.extract_strided_slice %45 {offsets = [0, 0], sizes = [8, 128], strides = [1, 1]} : vector<8x384xf32> to vector<8x128xf32>
    %48 = arith.addf %46, %47 : vector<8x128xf32>
    %49 = arith.negf %48 : vector<8x128xf32>
    %50 = math.exp %49 : vector<8x128xf32>
    %cst_17 = arith.constant 1.000000e+00 : f32
    %51 = vector.broadcast %cst_17 : f32 to vector<8x128xf32>
    %52 = arith.addf %51, %50 : vector<8x128xf32>
    %53 = arith.divf %51, %52 : vector<8x128xf32>
    %54 = vector.extract_strided_slice %44 {offsets = [0, 128], sizes = [8, 128], strides = [1, 1]} : vector<8x384xf32> to vector<8x128xf32>
    %55 = vector.extract_strided_slice %45 {offsets = [0, 128], sizes = [8, 128], strides = [1, 1]} : vector<8x384xf32> to vector<8x128xf32>
    %56 = arith.addf %54, %55 : vector<8x128xf32>
    %57 = arith.negf %56 : vector<8x128xf32>
    %58 = math.exp %57 : vector<8x128xf32>
    %cst_18 = arith.constant 1.000000e+00 : f32
    %59 = vector.broadcast %cst_18 : f32 to vector<8x128xf32>
    %60 = arith.addf %59, %58 : vector<8x128xf32>
    %61 = arith.divf %59, %60 : vector<8x128xf32>
    %62 = vector.extract_strided_slice %44 {offsets = [0, 256], sizes = [8, 128], strides = [1, 1]} : vector<8x384xf32> to vector<8x128xf32>
    %63 = vector.extract_strided_slice %45 {offsets = [0, 256], sizes = [8, 128], strides = [1, 1]} : vector<8x384xf32> to vector<8x128xf32>
    %64 = vector.broadcast %4 : vector<1x128xf32> to vector<8x128xf32>
    %65 = arith.addf %63, %64 : vector<8x128xf32>
    %66 = arith.mulf %53, %65 : vector<8x128xf32>
    %67 = arith.addf %62, %66 : vector<8x128xf32>
    %68 = math.tanh %67 : vector<8x128xf32>
    %cst_19 = arith.constant 1.000000e+00 : f32
    %69 = vector.broadcast %cst_19 : f32 to vector<8x128xf32>
    %70 = arith.subf %69, %61 : vector<8x128xf32>
    %71 = arith.mulf %70, %68 : vector<8x128xf32>
    %72 = arith.mulf %61, %37 : vector<8x128xf32>
    %73 = arith.addf %71, %72 : vector<8x128xf32>
    %74 = arith.index_cast %c1_i32 : i32 to index
    %c0_20 = arith.constant 0 : index
    %c0_21 = arith.constant 0 : index
    %75 = vector.load %arg5[%74, %c0_20, %c0_21] : memref<8x8x128xf32, #tpu.memory_space<vmem>>, vector<1x8x128xf32>
    %76 = vector.shape_cast %75 : vector<1x8x128xf32> to vector<8x128xf32>
    %77 = vector.shape_cast %73 : vector<8x128xf32> to vector<1x8x128xf32>
    tpu.vector_store %arg5[%74, %c0_20, %c0_21], %77 {strides = array<i32>} : memref<8x8x128xf32, #tpu.memory_space<vmem>>, vector<1x8x128xf32>,
    %c2_i32 = arith.constant 2 : i32
    %78 = arith.index_cast %c2_i32 : i32 to index
    %c0_22 = arith.constant 0 : index
    %c0_23 = arith.constant 0 : index
    %79 = vector.load %arg1[%78, %c0_22, %c0_23] : memref<8x8x384xf32, #tpu.memory_space<vmem>>, vector<1x8x384xf32>
    %80 = vector.shape_cast %79 : vector<1x8x384xf32> to vector<8x384xf32>
    %cst_24 = arith.constant dense<0.000000e+00> : vector<8x384xf32>
    %81 = tpu.matmul %73, %3, %cst_24 {dimension_numbers = #tpu.dot_dimension_numbers<[1], [0], [0], [1], [0, 0, 1, 1], [], []>} : vector<8x128xf32>, vector<128x384xf32>, vector<8x384xf32> -> vector<8x384xf32>
    %82 = vector.extract_strided_slice %80 {offsets = [0, 0], sizes = [8, 128], strides = [1, 1]} : vector<8x384xf32> to vector<8x128xf32>
    %83 = vector.extract_strided_slice %81 {offsets = [0, 0], sizes = [8, 128], strides = [1, 1]} : vector<8x384xf32> to vector<8x128xf32>
    %84 = arith.addf %82, %83 : vector<8x128xf32>
    %85 = arith.negf %84 : vector<8x128xf32>
    %86 = math.exp %85 : vector<8x128xf32>
    %cst_25 = arith.constant 1.000000e+00 : f32
    %87 = vector.broadcast %cst_25 : f32 to vector<8x128xf32>
    %88 = arith.addf %87, %86 : vector<8x128xf32>
    %89 = arith.divf %87, %88 : vector<8x128xf32>
    %90 = vector.extract_strided_slice %80 {offsets = [0, 128], sizes = [8, 128], strides = [1, 1]} : vector<8x384xf32> to vector<8x128xf32>
    %91 = vector.extract_strided_slice %81 {offsets = [0, 128], sizes = [8, 128], strides = [1, 1]} : vector<8x384xf32> to vector<8x128xf32>
    %92 = arith.addf %90, %91 : vector<8x128xf32>
    %93 = arith.negf %92 : vector<8x128xf32>
    %94 = math.exp %93 : vector<8x128xf32>
    %cst_26 = arith.constant 1.000000e+00 : f32
    %95 = vector.broadcast %cst_26 : f32 to vector<8x128xf32>
    %96 = arith.addf %95, %94 : vector<8x128xf32>
    %97 = arith.divf %95, %96 : vector<8x128xf32>
    %98 = vector.extract_strided_slice %80 {offsets = [0, 256], sizes = [8, 128], strides = [1, 1]} : vector<8x384xf32> to vector<8x128xf32>
    %99 = vector.extract_strided_slice %81 {offsets = [0, 256], sizes = [8, 128], strides = [1, 1]} : vector<8x384xf32> to vector<8x128xf32>
    %100 = vector.broadcast %4 : vector<1x128xf32> to vector<8x128xf32>
    %101 = arith.addf %99, %100 : vector<8x128xf32>
    %102 = arith.mulf %89, %101 : vector<8x128xf32>
    %103 = arith.addf %98, %102 : vector<8x128xf32>
    %104 = math.tanh %103 : vector<8x128xf32>
    %cst_27 = arith.constant 1.000000e+00 : f32
    %105 = vector.broadcast %cst_27 : f32 to vector<8x128xf32>
    %106 = arith.subf %105, %97 : vector<8x128xf32>
    %107 = arith.mulf %106, %104 : vector<8x128xf32>
    %108 = arith.mulf %97, %73 : vector<8x128xf32>
    %109 = arith.addf %107, %108 : vector<8x128xf32>
    %110 = arith.index_cast %c2_i32 : i32 to index
    %c0_28 = arith.constant 0 : index
    %c0_29 = arith.constant 0 : index
    %111 = vector.load %arg5[%110, %c0_28, %c0_29] : memref<8x8x128xf32, #tpu.memory_space<vmem>>, vector<1x8x128xf32>
    %112 = vector.shape_cast %111 : vector<1x8x128xf32> to vector<8x128xf32>
    %113 = vector.shape_cast %109 : vector<8x128xf32> to vector<1x8x128xf32>
    tpu.vector_store %arg5[%110, %c0_28, %c0_29], %113 {strides = array<i32>} : memref<8x8x128xf32, #tpu.memory_space<vmem>>, vector<1x8x128xf32>,
    %c3_i32 = arith.constant 3 : i32
    %114 = arith.index_cast %c3_i32 : i32 to index
    %c0_30 = arith.constant 0 : index
    %c0_31 = arith.constant 0 : index
    %115 = vector.load %arg1[%114, %c0_30, %c0_31] : memref<8x8x384xf32, #tpu.memory_space<vmem>>, vector<1x8x384xf32>
    %116 = vector.shape_cast %115 : vector<1x8x384xf32> to vector<8x384xf32>
    %cst_32 = arith.constant dense<0.000000e+00> : vector<8x384xf32>
    %117 = tpu.matmul %109, %3, %cst_32 {dimension_numbers = #tpu.dot_dimension_numbers<[1], [0], [0], [1], [0, 0, 1, 1], [], []>} : vector<8x128xf32>, vector<128x384xf32>, vector<8x384xf32> -> vector<8x384xf32>
    %118 = vector.extract_strided_slice %116 {offsets = [0, 0], sizes = [8, 128], strides = [1, 1]} : vector<8x384xf32> to vector<8x128xf32>
    %119 = vector.extract_strided_slice %117 {offsets = [0, 0], sizes = [8, 128], strides = [1, 1]} : vector<8x384xf32> to vector<8x128xf32>
    %120 = arith.addf %118, %119 : vector<8x128xf32>
    %121 = arith.negf %120 : vector<8x128xf32>
    %122 = math.exp %121 : vector<8x128xf32>
    %cst_33 = arith.constant 1.000000e+00 : f32
    %123 = vector.broadcast %cst_33 : f32 to vector<8x128xf32>
    %124 = arith.addf %123, %122 : vector<8x128xf32>
    %125 = arith.divf %123, %124 : vector<8x128xf32>
    %126 = vector.extract_strided_slice %116 {offsets = [0, 128], sizes = [8, 128], strides = [1, 1]} : vector<8x384xf32> to vector<8x128xf32>
    %127 = vector.extract_strided_slice %117 {offsets = [0, 128], sizes = [8, 128], strides = [1, 1]} : vector<8x384xf32> to vector<8x128xf32>
    %128 = arith.addf %126, %127 : vector<8x128xf32>
    %129 = arith.negf %128 : vector<8x128xf32>
    %130 = math.exp %129 : vector<8x128xf32>
    %cst_34 = arith.constant 1.000000e+00 : f32
    %131 = vector.broadcast %cst_34 : f32 to vector<8x128xf32>
    %132 = arith.addf %131, %130 : vector<8x128xf32>
    %133 = arith.divf %131, %132 : vector<8x128xf32>
    %134 = vector.extract_strided_slice %116 {offsets = [0, 256], sizes = [8, 128], strides = [1, 1]} : vector<8x384xf32> to vector<8x128xf32>
    %135 = vector.extract_strided_slice %117 {offsets = [0, 256], sizes = [8, 128], strides = [1, 1]} : vector<8x384xf32> to vector<8x128xf32>
    %136 = vector.broadcast %4 : vector<1x128xf32> to vector<8x128xf32>
    %137 = arith.addf %135, %136 : vector<8x128xf32>
    %138 = arith.mulf %125, %137 : vector<8x128xf32>
    %139 = arith.addf %134, %138 : vector<8x128xf32>
    %140 = math.tanh %139 : vector<8x128xf32>
    %cst_35 = arith.constant 1.000000e+00 : f32
    %141 = vector.broadcast %cst_35 : f32 to vector<8x128xf32>
    %142 = arith.subf %141, %133 : vector<8x128xf32>
    %143 = arith.mulf %142, %140 : vector<8x128xf32>
    %144 = arith.mulf %133, %109 : vector<8x128xf32>
    %145 = arith.addf %143, %144 : vector<8x128xf32>
    %146 = arith.index_cast %c3_i32 : i32 to index
    %c0_36 = arith.constant 0 : index
    %c0_37 = arith.constant 0 : index
    %147 = vector.load %arg5[%146, %c0_36, %c0_37] : memref<8x8x128xf32, #tpu.memory_space<vmem>>, vector<1x8x128xf32>
    %148 = vector.shape_cast %147 : vector<1x8x128xf32> to vector<8x128xf32>
    %149 = vector.shape_cast %145 : vector<8x128xf32> to vector<1x8x128xf32>
    tpu.vector_store %arg5[%146, %c0_36, %c0_37], %149 {strides = array<i32>} : memref<8x8x128xf32, #tpu.memory_space<vmem>>, vector<1x8x128xf32>,
    %c4_i32 = arith.constant 4 : i32
    %150 = arith.index_cast %c4_i32 : i32 to index
    %c0_38 = arith.constant 0 : index
    %c0_39 = arith.constant 0 : index
    %151 = vector.load %arg1[%150, %c0_38, %c0_39] : memref<8x8x384xf32, #tpu.memory_space<vmem>>, vector<1x8x384xf32>
    %152 = vector.shape_cast %151 : vector<1x8x384xf32> to vector<8x384xf32>
    %cst_40 = arith.constant dense<0.000000e+00> : vector<8x384xf32>
    %153 = tpu.matmul %145, %3, %cst_40 {dimension_numbers = #tpu.dot_dimension_numbers<[1], [0], [0], [1], [0, 0, 1, 1], [], []>} : vector<8x128xf32>, vector<128x384xf32>, vector<8x384xf32> -> vector<8x384xf32>
    %154 = vector.extract_strided_slice %152 {offsets = [0, 0], sizes = [8, 128], strides = [1, 1]} : vector<8x384xf32> to vector<8x128xf32>
    %155 = vector.extract_strided_slice %153 {offsets = [0, 0], sizes = [8, 128], strides = [1, 1]} : vector<8x384xf32> to vector<8x128xf32>
    %156 = arith.addf %154, %155 : vector<8x128xf32>
    %157 = arith.negf %156 : vector<8x128xf32>
    %158 = math.exp %157 : vector<8x128xf32>
    %cst_41 = arith.constant 1.000000e+00 : f32
    %159 = vector.broadcast %cst_41 : f32 to vector<8x128xf32>
    %160 = arith.addf %159, %158 : vector<8x128xf32>
    %161 = arith.divf %159, %160 : vector<8x128xf32>
    %162 = vector.extract_strided_slice %152 {offsets = [0, 128], sizes = [8, 128], strides = [1, 1]} : vector<8x384xf32> to vector<8x128xf32>
    %163 = vector.extract_strided_slice %153 {offsets = [0, 128], sizes = [8, 128], strides = [1, 1]} : vector<8x384xf32> to vector<8x128xf32>
    %164 = arith.addf %162, %163 : vector<8x128xf32>
    %165 = arith.negf %164 : vector<8x128xf32>
    %166 = math.exp %165 : vector<8x128xf32>
    %cst_42 = arith.constant 1.000000e+00 : f32
    %167 = vector.broadcast %cst_42 : f32 to vector<8x128xf32>
    %168 = arith.addf %167, %166 : vector<8x128xf32>
    %169 = arith.divf %167, %168 : vector<8x128xf32>
    %170 = vector.extract_strided_slice %152 {offsets = [0, 256], sizes = [8, 128], strides = [1, 1]} : vector<8x384xf32> to vector<8x128xf32>
    %171 = vector.extract_strided_slice %153 {offsets = [0, 256], sizes = [8, 128], strides = [1, 1]} : vector<8x384xf32> to vector<8x128xf32>
    %172 = vector.broadcast %4 : vector<1x128xf32> to vector<8x128xf32>
    %173 = arith.addf %171, %172 : vector<8x128xf32>
    %174 = arith.mulf %161, %173 : vector<8x128xf32>
    %175 = arith.addf %170, %174 : vector<8x128xf32>
    %176 = math.tanh %175 : vector<8x128xf32>
    %cst_43 = arith.constant 1.000000e+00 : f32
    %177 = vector.broadcast %cst_43 : f32 to vector<8x128xf32>
    %178 = arith.subf %177, %169 : vector<8x128xf32>
    %179 = arith.mulf %178, %176 : vector<8x128xf32>
    %180 = arith.mulf %169, %145 : vector<8x128xf32>
    %181 = arith.addf %179, %180 : vector<8x128xf32>
    %182 = arith.index_cast %c4_i32 : i32 to index
    %c0_44 = arith.constant 0 : index
    %c0_45 = arith.constant 0 : index
    %183 = vector.load %arg5[%182, %c0_44, %c0_45] : memref<8x8x128xf32, #tpu.memory_space<vmem>>, vector<1x8x128xf32>
    %184 = vector.shape_cast %183 : vector<1x8x128xf32> to vector<8x128xf32>
    %185 = vector.shape_cast %181 : vector<8x128xf32> to vector<1x8x128xf32>
    tpu.vector_store %arg5[%182, %c0_44, %c0_45], %185 {strides = array<i32>} : memref<8x8x128xf32, #tpu.memory_space<vmem>>, vector<1x8x128xf32>,
    %c5_i32 = arith.constant 5 : i32
    %186 = arith.index_cast %c5_i32 : i32 to index
    %c0_46 = arith.constant 0 : index
    %c0_47 = arith.constant 0 : index
    %187 = vector.load %arg1[%186, %c0_46, %c0_47] : memref<8x8x384xf32, #tpu.memory_space<vmem>>, vector<1x8x384xf32>
    %188 = vector.shape_cast %187 : vector<1x8x384xf32> to vector<8x384xf32>
    %cst_48 = arith.constant dense<0.000000e+00> : vector<8x384xf32>
    %189 = tpu.matmul %181, %3, %cst_48 {dimension_numbers = #tpu.dot_dimension_numbers<[1], [0], [0], [1], [0, 0, 1, 1], [], []>} : vector<8x128xf32>, vector<128x384xf32>, vector<8x384xf32> -> vector<8x384xf32>
    %190 = vector.extract_strided_slice %188 {offsets = [0, 0], sizes = [8, 128], strides = [1, 1]} : vector<8x384xf32> to vector<8x128xf32>
    %191 = vector.extract_strided_slice %189 {offsets = [0, 0], sizes = [8, 128], strides = [1, 1]} : vector<8x384xf32> to vector<8x128xf32>
    %192 = arith.addf %190, %191 : vector<8x128xf32>
    %193 = arith.negf %192 : vector<8x128xf32>
    %194 = math.exp %193 : vector<8x128xf32>
    %cst_49 = arith.constant 1.000000e+00 : f32
    %195 = vector.broadcast %cst_49 : f32 to vector<8x128xf32>
    %196 = arith.addf %195, %194 : vector<8x128xf32>
    %197 = arith.divf %195, %196 : vector<8x128xf32>
    %198 = vector.extract_strided_slice %188 {offsets = [0, 128], sizes = [8, 128], strides = [1, 1]} : vector<8x384xf32> to vector<8x128xf32>
    %199 = vector.extract_strided_slice %189 {offsets = [0, 128], sizes = [8, 128], strides = [1, 1]} : vector<8x384xf32> to vector<8x128xf32>
    %200 = arith.addf %198, %199 : vector<8x128xf32>
    %201 = arith.negf %200 : vector<8x128xf32>
    %202 = math.exp %201 : vector<8x128xf32>
    %cst_50 = arith.constant 1.000000e+00 : f32
    %203 = vector.broadcast %cst_50 : f32 to vector<8x128xf32>
    %204 = arith.addf %203, %202 : vector<8x128xf32>
    %205 = arith.divf %203, %204 : vector<8x128xf32>
    %206 = vector.extract_strided_slice %188 {offsets = [0, 256], sizes = [8, 128], strides = [1, 1]} : vector<8x384xf32> to vector<8x128xf32>
    %207 = vector.extract_strided_slice %189 {offsets = [0, 256], sizes = [8, 128], strides = [1, 1]} : vector<8x384xf32> to vector<8x128xf32>
    %208 = vector.broadcast %4 : vector<1x128xf32> to vector<8x128xf32>
    %209 = arith.addf %207, %208 : vector<8x128xf32>
    %210 = arith.mulf %197, %209 : vector<8x128xf32>
    %211 = arith.addf %206, %210 : vector<8x128xf32>
    %212 = math.tanh %211 : vector<8x128xf32>
    %cst_51 = arith.constant 1.000000e+00 : f32
    %213 = vector.broadcast %cst_51 : f32 to vector<8x128xf32>
    %214 = arith.subf %213, %205 : vector<8x128xf32>
    %215 = arith.mulf %214, %212 : vector<8x128xf32>
    %216 = arith.mulf %205, %181 : vector<8x128xf32>
    %217 = arith.addf %215, %216 : vector<8x128xf32>
    %218 = arith.index_cast %c5_i32 : i32 to index
    %c0_52 = arith.constant 0 : index
    %c0_53 = arith.constant 0 : index
    %219 = vector.load %arg5[%218, %c0_52, %c0_53] : memref<8x8x128xf32, #tpu.memory_space<vmem>>, vector<1x8x128xf32>
    %220 = vector.shape_cast %219 : vector<1x8x128xf32> to vector<8x128xf32>
    %221 = vector.shape_cast %217 : vector<8x128xf32> to vector<1x8x128xf32>
    tpu.vector_store %arg5[%218, %c0_52, %c0_53], %221 {strides = array<i32>} : memref<8x8x128xf32, #tpu.memory_space<vmem>>, vector<1x8x128xf32>,
    %c6_i32 = arith.constant 6 : i32
    %222 = arith.index_cast %c6_i32 : i32 to index
    %c0_54 = arith.constant 0 : index
    %c0_55 = arith.constant 0 : index
    %223 = vector.load %arg1[%222, %c0_54, %c0_55] : memref<8x8x384xf32, #tpu.memory_space<vmem>>, vector<1x8x384xf32>
    %224 = vector.shape_cast %223 : vector<1x8x384xf32> to vector<8x384xf32>
    %cst_56 = arith.constant dense<0.000000e+00> : vector<8x384xf32>
    %225 = tpu.matmul %217, %3, %cst_56 {dimension_numbers = #tpu.dot_dimension_numbers<[1], [0], [0], [1], [0, 0, 1, 1], [], []>} : vector<8x128xf32>, vector<128x384xf32>, vector<8x384xf32> -> vector<8x384xf32>
    %226 = vector.extract_strided_slice %224 {offsets = [0, 0], sizes = [8, 128], strides = [1, 1]} : vector<8x384xf32> to vector<8x128xf32>
    %227 = vector.extract_strided_slice %225 {offsets = [0, 0], sizes = [8, 128], strides = [1, 1]} : vector<8x384xf32> to vector<8x128xf32>
    %228 = arith.addf %226, %227 : vector<8x128xf32>
    %229 = arith.negf %228 : vector<8x128xf32>
    %230 = math.exp %229 : vector<8x128xf32>
    %cst_57 = arith.constant 1.000000e+00 : f32
    %231 = vector.broadcast %cst_57 : f32 to vector<8x128xf32>
    %232 = arith.addf %231, %230 : vector<8x128xf32>
    %233 = arith.divf %231, %232 : vector<8x128xf32>
    %234 = vector.extract_strided_slice %224 {offsets = [0, 128], sizes = [8, 128], strides = [1, 1]} : vector<8x384xf32> to vector<8x128xf32>
    %235 = vector.extract_strided_slice %225 {offsets = [0, 128], sizes = [8, 128], strides = [1, 1]} : vector<8x384xf32> to vector<8x128xf32>
    %236 = arith.addf %234, %235 : vector<8x128xf32>
    %237 = arith.negf %236 : vector<8x128xf32>
    %238 = math.exp %237 : vector<8x128xf32>
    %cst_58 = arith.constant 1.000000e+00 : f32
    %239 = vector.broadcast %cst_58 : f32 to vector<8x128xf32>
    %240 = arith.addf %239, %238 : vector<8x128xf32>
    %241 = arith.divf %239, %240 : vector<8x128xf32>
    %242 = vector.extract_strided_slice %224 {offsets = [0, 256], sizes = [8, 128], strides = [1, 1]} : vector<8x384xf32> to vector<8x128xf32>
    %243 = vector.extract_strided_slice %225 {offsets = [0, 256], sizes = [8, 128], strides = [1, 1]} : vector<8x384xf32> to vector<8x128xf32>
    %244 = vector.broadcast %4 : vector<1x128xf32> to vector<8x128xf32>
    %245 = arith.addf %243, %244 : vector<8x128xf32>
    %246 = arith.mulf %233, %245 : vector<8x128xf32>
    %247 = arith.addf %242, %246 : vector<8x128xf32>
    %248 = math.tanh %247 : vector<8x128xf32>
    %cst_59 = arith.constant 1.000000e+00 : f32
    %249 = vector.broadcast %cst_59 : f32 to vector<8x128xf32>
    %250 = arith.subf %249, %241 : vector<8x128xf32>
    %251 = arith.mulf %250, %248 : vector<8x128xf32>
    %252 = arith.mulf %241, %217 : vector<8x128xf32>
    %253 = arith.addf %251, %252 : vector<8x128xf32>
    %254 = arith.index_cast %c6_i32 : i32 to index
    %c0_60 = arith.constant 0 : index
    %c0_61 = arith.constant 0 : index
    %255 = vector.load %arg5[%254, %c0_60, %c0_61] : memref<8x8x128xf32, #tpu.memory_space<vmem>>, vector<1x8x128xf32>
    %256 = vector.shape_cast %255 : vector<1x8x128xf32> to vector<8x128xf32>
    %257 = vector.shape_cast %253 : vector<8x128xf32> to vector<1x8x128xf32>
    tpu.vector_store %arg5[%254, %c0_60, %c0_61], %257 {strides = array<i32>} : memref<8x8x128xf32, #tpu.memory_space<vmem>>, vector<1x8x128xf32>,
    %c7_i32 = arith.constant 7 : i32
    %258 = arith.index_cast %c7_i32 : i32 to index
    %c0_62 = arith.constant 0 : index
    %c0_63 = arith.constant 0 : index
    %259 = vector.load %arg1[%258, %c0_62, %c0_63] : memref<8x8x384xf32, #tpu.memory_space<vmem>>, vector<1x8x384xf32>
    %260 = vector.shape_cast %259 : vector<1x8x384xf32> to vector<8x384xf32>
    %cst_64 = arith.constant dense<0.000000e+00> : vector<8x384xf32>
    %261 = tpu.matmul %253, %3, %cst_64 {dimension_numbers = #tpu.dot_dimension_numbers<[1], [0], [0], [1], [0, 0, 1, 1], [], []>} : vector<8x128xf32>, vector<128x384xf32>, vector<8x384xf32> -> vector<8x384xf32>
    %262 = vector.extract_strided_slice %260 {offsets = [0, 0], sizes = [8, 128], strides = [1, 1]} : vector<8x384xf32> to vector<8x128xf32>
    %263 = vector.extract_strided_slice %261 {offsets = [0, 0], sizes = [8, 128], strides = [1, 1]} : vector<8x384xf32> to vector<8x128xf32>
    %264 = arith.addf %262, %263 : vector<8x128xf32>
    %265 = arith.negf %264 : vector<8x128xf32>
    %266 = math.exp %265 : vector<8x128xf32>
    %cst_65 = arith.constant 1.000000e+00 : f32
    %267 = vector.broadcast %cst_65 : f32 to vector<8x128xf32>
    %268 = arith.addf %267, %266 : vector<8x128xf32>
    %269 = arith.divf %267, %268 : vector<8x128xf32>
    %270 = vector.extract_strided_slice %260 {offsets = [0, 128], sizes = [8, 128], strides = [1, 1]} : vector<8x384xf32> to vector<8x128xf32>
    %271 = vector.extract_strided_slice %261 {offsets = [0, 128], sizes = [8, 128], strides = [1, 1]} : vector<8x384xf32> to vector<8x128xf32>
    %272 = arith.addf %270, %271 : vector<8x128xf32>
    %273 = arith.negf %272 : vector<8x128xf32>
    %274 = math.exp %273 : vector<8x128xf32>
    %cst_66 = arith.constant 1.000000e+00 : f32
    %275 = vector.broadcast %cst_66 : f32 to vector<8x128xf32>
    %276 = arith.addf %275, %274 : vector<8x128xf32>
    %277 = arith.divf %275, %276 : vector<8x128xf32>
    %278 = vector.extract_strided_slice %260 {offsets = [0, 256], sizes = [8, 128], strides = [1, 1]} : vector<8x384xf32> to vector<8x128xf32>
    %279 = vector.extract_strided_slice %261 {offsets = [0, 256], sizes = [8, 128], strides = [1, 1]} : vector<8x384xf32> to vector<8x128xf32>
    %280 = vector.broadcast %4 : vector<1x128xf32> to vector<8x128xf32>
    %281 = arith.addf %279, %280 : vector<8x128xf32>
    %282 = arith.mulf %269, %281 : vector<8x128xf32>
    %283 = arith.addf %278, %282 : vector<8x128xf32>
    %284 = math.tanh %283 : vector<8x128xf32>
    %cst_67 = arith.constant 1.000000e+00 : f32
    %285 = vector.broadcast %cst_67 : f32 to vector<8x128xf32>
    %286 = arith.subf %285, %277 : vector<8x128xf32>
    %287 = arith.mulf %286, %284 : vector<8x128xf32>
    %288 = arith.mulf %277, %253 : vector<8x128xf32>
    %289 = arith.addf %287, %288 : vector<8x128xf32>
    %290 = arith.index_cast %c7_i32 : i32 to index
    %c0_68 = arith.constant 0 : index
    %c0_69 = arith.constant 0 : index
    %291 = vector.load %arg5[%290, %c0_68, %c0_69] : memref<8x8x128xf32, #tpu.memory_space<vmem>>, vector<1x8x128xf32>
    %292 = vector.shape_cast %291 : vector<1x8x128xf32> to vector<8x128xf32>
    %293 = vector.shape_cast %289 : vector<8x128xf32> to vector<1x8x128xf32>
    tpu.vector_store %arg5[%290, %c0_68, %c0_69], %293 {strides = array<i32>} : memref<8x8x128xf32, #tpu.memory_space<vmem>>, vector<1x8x128xf32>,
    %c8_i32 = arith.constant 8 : i32
    %c0_70 = arith.constant 0 : index
    %c0_71 = arith.constant 0 : index
    %294 = vector.load %arg6[%c0_70, %c0_71] : memref<8x128xf32, #tpu.memory_space<vmem>>, vector<8x128xf32>
    tpu.vector_store %arg6[%c0_70, %c0_71], %289 {strides = array<i32>} : memref<8x128xf32, #tpu.memory_space<vmem>>, vector<8x128xf32>,
    return
  }
  func.func @transform_0(%arg0: i32) -> (i32, i32, i32) {
    %c0_i32 = arith.constant 0 : i32
    %c0_i32_0 = arith.constant 0 : i32
    %c0_i32_1 = arith.constant 0 : i32
    return %arg0, %c0_i32, %c0_i32_0 : i32, i32, i32
  }
  func.func @transform_1(%arg0: i32) -> (i32, i32) {
    %c0_i32 = arith.constant 0 : i32
    %c0_i32_0 = arith.constant 0 : i32
    %c0_i32_1 = arith.constant 0 : i32
    return %c0_i32, %c0_i32_0 : i32, i32
  }
  func.func @transform_2(%arg0: i32) -> (i32, i32) {
    %c0_i32 = arith.constant 0 : i32
    %c0_i32_0 = arith.constant 0 : i32
    %c0_i32_1 = arith.constant 0 : i32
    return %c0_i32, %c0_i32_0 : i32, i32
  }
  func.func @transform_3(%arg0: i32) -> (i32, i32) {
    %c0_i32 = arith.constant 0 : i32
    %c0_i32_0 = arith.constant 0 : i32
    %c0_i32_1 = arith.constant 0 : i32
    return %c0_i32, %c0_i32_0 : i32, i32
  }
  func.func @transform_4(%arg0: i32) -> (i32, i32, i32) {
    %c0_i32 = arith.constant 0 : i32
    %c0_i32_0 = arith.constant 0 : i32
    %c0_i32_1 = arith.constant 0 : i32
    return %arg0, %c0_i32, %c0_i32_0 : i32, i32, i32
  }
}

</mosaic_0001>

<llo_original>
// kernel: act_rnn_decoder_forward.5
$region0: #{act_rnn_decoder_forward.5}
  #allocation0 [shape = 'u32[]', space=smem, size = 0x4, offset = 0x4, fixed_abs, tag = 'smem constant byte address 0x4 - core index']
  #allocation1 [shape = 'u32[144,128]{1,0:T(1,128)}', space=vmem, size = 0x12000, scoped, tag = 'internal scratch']
  %s0 = inlined_call_operand.vmem [shape: bf16[64,128], index: 0, kind: input, shape index: {}]
  %s1 = inlined_call_operand.vmem [shape: bf16[128,128], index: 1, kind: input, shape index: {}]
  %s2 = inlined_call_operand.vmem [shape: f32[1,128], index: 2, kind: input, shape index: {}]
  %s3 = inlined_call_operand.vmem [shape: f32[64,128], index: 3, kind: output, shape index: {}]
  %s4 = sld [smem:[#allocation0]]
  $region22: #{act_rnn_decoder_forward.5} parent=0
    _
  %s6 = ssub.s32 1, %s4
  %s7 = scalar_select 0, %s6, %s4
  // Predicated region
  $region2: #{act_rnn_decoder_forward.5} parent=0 // pred_check
    _
  $region3: #{act_rnn_decoder_forward.5} parent=0 // pred_check_branch
    %9 = sbr.rel (0) target = $region5
  $region4: #{act_rnn_decoder_forward.5} parent=0 // pred_region
    _
  $region5: #{act_rnn_decoder_forward.5} parent=0 // pred_fallthru
    _
  // Predicated region
  $region6: #{act_rnn_decoder_forward.5} parent=0 // pred_check
    _
  $region7: #{act_rnn_decoder_forward.5} parent=0 // pred_check_branch
    %11 = sbr.rel (0) target = $region9
  $region8: #{act_rnn_decoder_forward.5} parent=0 // pred_region
    _
  $region9: #{act_rnn_decoder_forward.5} parent=0 // pred_fallthru
    _
  // Predicated region
  $region10: #{act_rnn_decoder_forward.5} parent=0 // pred_check
    _
  $region11: #{act_rnn_decoder_forward.5} parent=0 // pred_check_branch
    %13 = sbr.rel (0) target = $region13
  $region12: #{act_rnn_decoder_forward.5} parent=0 // pred_region
    _
  $region13: #{act_rnn_decoder_forward.5} parent=0 // pred_fallthru
    _
  %v15 = vld [vmem:[%s0] sm:$0xf]
  %v16 = vld [vmem:[%s0 + $0x4] sm:$0xf]
  %v17 = vld [vmem:[%s0 + $0x8] sm:$0xf]
  %v18 = vld [vmem:[%s0 + $0xc] sm:$0xf]
  %v19 = vld [vmem:[%s0 + $0x10] sm:$0xf]
  %v20 = vld [vmem:[%s0 + $0x14] sm:$0xf]
  %v21 = vld [vmem:[%s0 + $0x18] sm:$0xf]
  %v22 = vld [vmem:[%s0 + $0x1c] sm:$0xf]
  %v23 = vld [vmem:[%s1] sm:$0xf]
  %v24 = vld [vmem:[%s1 + $0x4] sm:$0xf]
  %v25 = vld [vmem:[%s1 + $0x8] sm:$0xf]
  %v26 = vld [vmem:[%s1 + $0xc] sm:$0xf]
  %v27 = vld [vmem:[%s1 + $0x10] sm:$0xf]
  %v28 = vld [vmem:[%s1 + $0x14] sm:$0xf]
  %v29 = vld [vmem:[%s1 + $0x18] sm:$0xf]
  %v30 = vld [vmem:[%s1 + $0x1c] sm:$0xf]
  %v31 = vld [vmem:[%s1 + $0x20] sm:$0xf]
  %v32 = vld [vmem:[%s1 + $0x24] sm:$0xf]
  %v33 = vld [vmem:[%s1 + $0x28] sm:$0xf]
  %v34 = vld [vmem:[%s1 + $0x2c] sm:$0xf]
  %v35 = vld [vmem:[%s1 + $0x30] sm:$0xf]
  %v36 = vld [vmem:[%s1 + $0x34] sm:$0xf]
  %v37 = vld [vmem:[%s1 + $0x38] sm:$0xf]
  %v38 = vld [vmem:[%s1 + $0x3c] sm:$0xf]
  %v39 = vld [vmem:[%s2] sm:$0x1]
  %v41 = vlaneseq
  %v42 = vshrl.u32 %v41, 7
  %v43 = vsub.s32 0, %v42
  %v44 = vrot.slane %v39, %v43
  %v54 = vunpack.c.l.b16 %v15
  %v55 = vunpack.c.l.b16 %v16
  %v56 = vunpack.c.l.b16 %v17
  %v57 = vunpack.c.l.b16 %v18
  %v58 = vunpack.c.l.b16 %v19
  %v59 = vunpack.c.l.b16 %v20
  %v60 = vunpack.c.l.b16 %v21
  %v61 = vunpack.c.l.b16 %v22
  %v62 = vpack.c.b16 %v55, %v54
  %v63 = vpack.c.b16 %v57, %v56
  %v64 = vpack.c.b16 %v59, %v58
  %v65 = vpack.c.b16 %v61, %v60
  %v86 = vunpack.c.l.b16 %v23
  %v87 = vunpack.c.l.b16 %v24
  %v88 = vunpack.c.l.b16 %v25
  %v89 = vunpack.c.l.b16 %v26
  %v90 = vunpack.c.l.b16 %v27
  %v91 = vunpack.c.l.b16 %v28
  %v92 = vunpack.c.l.b16 %v29
  %v93 = vunpack.c.l.b16 %v30
  %v94 = vunpack.c.l.b16 %v31
  %v95 = vunpack.c.l.b16 %v32
  %v96 = vunpack.c.l.b16 %v33
  %v97 = vunpack.c.l.b16 %v34
  %v98 = vunpack.c.l.b16 %v35
  %v99 = vunpack.c.l.b16 %v36
  %v100 = vunpack.c.l.b16 %v37
  %v101 = vunpack.c.l.b16 %v38
  %v102 = vpack.c.b16 %v87, %v86
  %v103 = vpack.c.b16 %v89, %v88
  %v104 = vpack.c.b16 %v91, %v90
  %v105 = vpack.c.b16 %v93, %v92
  %v106 = vpack.c.b16 %v95, %v94
  %v107 = vpack.c.b16 %v97, %v96
  %v108 = vpack.c.b16 %v99, %v98
  %v109 = vpack.c.b16 %v101, %v100
  %118 = vmatprep.subr.bf16.mxu0 0
  %119 = vmatpush1.bf16.msra.mxu0 %v109
  %120 = vmatprep.subr.bf16.mxu0 0
  %121 = vmatpush1.bf16.msra.mxu0 %v108
  %122 = vmatprep.subr.bf16.mxu0 0
  %123 = vmatpush1.bf16.msra.mxu0 %v107
  %124 = vmatprep.subr.bf16.mxu0 0
  %125 = vmatpush1.bf16.msra.mxu0 %v106
  %126 = vmatprep.subr.bf16.mxu0 0
  %127 = vmatpush1.bf16.msra.mxu0 %v105
  %128 = vmatprep.subr.bf16.mxu0 0
  %129 = vmatpush1.bf16.msra.mxu0 %v104
  %130 = vmatprep.subr.bf16.mxu0 0
  %131 = vmatpush1.bf16.msra.mxu0 %v103
  %132 = vmatprep.subr.bf16.mxu0 0
  %133 = vmatpush1.bf16.msra.mxu0 %v102
  %134 = vmatprep.subr.bf16.mxu0 0
  %135 = vmatpush2.bf16.msra.mxu0 0
  %136 = vmatprep.subr.bf16.mxu0 0
  %137 = vmatpush2.bf16.msra.mxu0 0
  %138 = vmatprep.subr.bf16.mxu0 0
  %139 = vmatpush2.bf16.msra.mxu0 0
  %140 = vmatprep.subr.bf16.mxu0 0
  %141 = vmatpush2.bf16.msra.mxu0 0
  %142 = vmatprep.subr.bf16.mxu0 0
  %143 = vmatpush2.bf16.msra.mxu0 0
  %144 = vmatprep.subr.bf16.mxu0 0
  %145 = vmatpush2.bf16.msra.mxu0 0
  %146 = vmatprep.subr.bf16.mxu0 0
  %147 = vmatpush2.bf16.msra.mxu0 0
  %148 = vmatprep.subr.bf16.mxu0 0
  %149 = vmatpush2.bf16.msra.mxu0 0
  %150 = vmatprep.mubr.bf16.mxu0 0
  %151 = vmatmul.mubr.bf16.gmra.mxu0 %v62
  %v152 = vpop.f32.mrf.mxu0
  %v153 = vadd.f32 %v44, %v152
  %v154 = vpop.f32.mrf.mxu0
  %v155 = vpop.f32.mrf.mxu0
  %v156 = vadd.f32 %v44, %v155
  %v157 = vpop.f32.mrf.mxu0
  %158 = vmatprep.mubr.bf16.mxu0 0
  %159 = vmatmul.mubr.bf16.gmra.mxu0 %v63
  %v160 = vpop.f32.mrf.mxu0
  %v161 = vadd.f32 %v44, %v160
  %v162 = vpop.f32.mrf.mxu0
  %v163 = vpop.f32.mrf.mxu0
  %v164 = vadd.f32 %v44, %v163
  %v165 = vpop.f32.mrf.mxu0
  %166 = vmatprep.mubr.bf16.mxu0 0
  %167 = vmatmul.mubr.bf16.gmra.mxu0 %v64
  %v168 = vpop.f32.mrf.mxu0
  %v169 = vadd.f32 %v44, %v168
  %v170 = vpop.f32.mrf.mxu0
  %v171 = vpop.f32.mrf.mxu0
  %v172 = vadd.f32 %v44, %v171
  %v173 = vpop.f32.mrf.mxu0
  %174 = vmatprep.mubr.bf16.mxu0 0
  %175 = vmatmul.mubr.bf16.gmra.mxu0 %v65
  %v176 = vpop.f32.mrf.mxu0
  %v177 = vadd.f32 %v44, %v176
  %v178 = vpop.f32.mrf.mxu0
  %v179 = vpop.f32.mrf.mxu0
  %v180 = vadd.f32 %v44, %v179
  %v181 = vpop.f32.mrf.mxu0
  %182 = vdwg.mxu0
  %183 = vst [vmem:[%s3] sm:$0xff] %v153
  %184 = vst [vmem:[%s3 + $0x8] sm:$0xff] %v156
  %185 = vst [vmem:[%s3 + $0x10] sm:$0xff] %v161
  %186 = vst [vmem:[%s3 + $0x18] sm:$0xff] %v164
  %187 = vst [vmem:[%s3 + $0x20] sm:$0xff] %v169
  %188 = vst [vmem:[%s3 + $0x28] sm:$0xff] %v172
  %189 = vst [vmem:[%s3 + $0x30] sm:$0xff] %v177
  %190 = vst [vmem:[%s3 + $0x38] sm:$0xff] %v180
  // Predicated region
  $region14: #{act_rnn_decoder_forward.5} parent=0 // pred_check
    _
  $region15: #{act_rnn_decoder_forward.5} parent=0 // pred_check_branch
    %192 = sbr.rel (0) target = $region17
  $region16: #{act_rnn_decoder_forward.5} parent=0 // pred_region
    _
  $region17: #{act_rnn_decoder_forward.5} parent=0 // pred_fallthru
    _
  // Predicated region
  $region18: #{act_rnn_decoder_forward.5} parent=0 // pred_check
    _
  $region19: #{act_rnn_decoder_forward.5} parent=0 // pred_check_branch
    %194 = sbr.rel (0) target = $region21
  $region20: #{act_rnn_decoder_forward.5} parent=0 // pred_region
    _
  $region21: #{act_rnn_decoder_forward.5} parent=0 // pred_fallthru
    _

// kernel: act_rnn_decoder_forward.3
$region0: #{act_rnn_decoder_forward.3}
  #allocation0 [shape = 'u32[]', space=smem, size = 0x4, offset = 0x4, fixed_abs, tag = 'smem constant byte address 0x4 - core index']
  #allocation1 [shape = 'u32[144,128]{1,0:T(1,128)}', space=vmem, size = 0x12000, scoped, tag = 'internal scratch']
  %s0 = inlined_call_operand.vmem [shape: bf16[64,32], index: 0, kind: input, shape index: {}]
  %s1 = inlined_call_operand.vmem [shape: bf16[32,384], index: 1, kind: input, shape index: {}]
  %s2 = inlined_call_operand.vmem [shape: f32[1,384], index: 2, kind: input, shape index: {}]
  %s3 = inlined_call_operand.vmem [shape: f32[64,384], index: 3, kind: output, shape index: {}]
  %s4 = sld [smem:[#allocation0]]
  $region22: #{act_rnn_decoder_forward.3} parent=0
    _
  %s6 = ssub.s32 1, %s4
  %s7 = scalar_select 0, %s6, %s4
  // Predicated region
  $region2: #{act_rnn_decoder_forward.3} parent=0 // pred_check
    _
  $region3: #{act_rnn_decoder_forward.3} parent=0 // pred_check_branch
    %9 = sbr.rel (0) target = $region5
  $region4: #{act_rnn_decoder_forward.3} parent=0 // pred_region
    _
  $region5: #{act_rnn_decoder_forward.3} parent=0 // pred_fallthru
    _
  // Predicated region
  $region6: #{act_rnn_decoder_forward.3} parent=0 // pred_check
    _
  $region7: #{act_rnn_decoder_forward.3} parent=0 // pred_check_branch
    %11 = sbr.rel (0) target = $region9
  $region8: #{act_rnn_decoder_forward.3} parent=0 // pred_region
    _
  $region9: #{act_rnn_decoder_forward.3} parent=0 // pred_fallthru
    _
  // Predicated region
  $region10: #{act_rnn_decoder_forward.3} parent=0 // pred_check
    _
  $region11: #{act_rnn_decoder_forward.3} parent=0 // pred_check_branch
    %13 = sbr.rel (0) target = $region13
  $region12: #{act_rnn_decoder_forward.3} parent=0 // pred_region
    _
  $region13: #{act_rnn_decoder_forward.3} parent=0 // pred_fallthru
    _
  %v15 = vld [vmem:[%s0] sm:$0xf]
  %v16 = vld [vmem:[%s0 + $0x4] sm:$0xf]
  %v17 = vld [vmem:[%s0 + $0x8] sm:$0xf]
  %v18 = vld [vmem:[%s0 + $0xc] sm:$0xf]
  %v19 = vld [vmem:[%s0 + $0x10] sm:$0xf]
  %v20 = vld [vmem:[%s0 + $0x14] sm:$0xf]
  %v21 = vld [vmem:[%s0 + $0x18] sm:$0xf]
  %v22 = vld [vmem:[%s0 + $0x1c] sm:$0xf]
  %v23 = vld [vmem:[%s1] sm:$0xff]
  %v24 = vld [vmem:[%s1 + $0x8] sm:$0xf]
  %v25 = vld [vmem:[%s1 + $0xc] sm:$0xff]
  %v26 = vld [vmem:[%s1 + $0x14] sm:$0xf]
  %v27 = vld [vmem:[%s1 + $0x18] sm:$0xff]
  %v28 = vld [vmem:[%s1 + $0x20] sm:$0xf]
  %v29 = vld [vmem:[%s1 + $0x24] sm:$0xff]
  %v30 = vld [vmem:[%s1 + $0x2c] sm:$0xf]
  %v31 = vld [vmem:[%s2] sm:$0x7]
  %v33 = vlaneseq
  %v34 = vshrl.u32 %v33, 7
  %v35 = vsub.s32 0, %v34
  %v36 = vrot.slane %v31, %v35
  %v37 = vlaneseq
  %v38 = vshrl.u32 %v37, 7
  %v39 = vsub.s32 1, %v38
  %v40 = vrot.slane %v31, %v39
  %v41 = vlaneseq
  %v42 = vshrl.u32 %v41, 7
  %v43 = vsub.s32 2, %v42
  %v44 = vrot.slane %v31, %v43
  %v56 = vunpack.c.l.b16 %v15
  %v57 = vunpack.c.l.b16 %v16
  %v58 = vunpack.c.l.b16 %v17
  %v59 = vunpack.c.l.b16 %v18
  %v60 = vunpack.c.l.b16 %v19
  %v61 = vunpack.c.l.b16 %v20
  %v62 = vunpack.c.l.b16 %v21
  %v63 = vunpack.c.l.b16 %v22
  %v64 = vpack.c.b16 %v57, %v56
  %v65 = vpack.c.b16 %v59, %v58
  %v66 = vpack.c.b16 %v61, %v60
  %v67 = vpack.c.b16 %v63, %v62
  %v76 = vunpack.c.l.b16 %v23
  %v77 = vunpack.c.h.b16 %v23
  %v78 = vunpack.c.l.b16 %v24
  %v79 = vunpack.c.l.b16 %v25
  %v80 = vunpack.c.h.b16 %v25
  %v81 = vunpack.c.l.b16 %v26
  %v82 = vunpack.c.l.b16 %v27
  %v83 = vunpack.c.h.b16 %v27
  %v84 = vunpack.c.l.b16 %v28
  %v85 = vunpack.c.l.b16 %v29
  %v86 = vunpack.c.h.b16 %v29
  %v87 = vunpack.c.l.b16 %v30
  %v88 = vpack.c.b16 %v79, %v76
  %v89 = vpack.c.b16 %v80, %v77
  %v90 = vpack.c.b16 %v81, %v78
  %v91 = vpack.c.b16 %v85, %v82
  %v92 = vpack.c.b16 %v86, %v83
  %v93 = vpack.c.b16 %v87, %v84
  %vm100 = vcmask 261120
  %v102 = vsel %vm100, %v64, 0
  %v105 = vsel %vm100, %v65, 0
  %v108 = vsel %vm100, %v66, 0
  %v111 = vsel %vm100, %v67, 0
  %113 = vmatprep.subr.bf16.mxu0 0
  %114 = vmatpush1.bf16.msra.mxu0 0
  %115 = vmatprep.subr.bf16.mxu0 0
  %116 = vmatpush1.bf16.msra.mxu0 0
  %117 = vmatprep.subr.bf16.mxu0 0
  %118 = vmatpush1.bf16.msra.mxu0 0
  %119 = vmatprep.subr.bf16.mxu0 0
  %120 = vmatpush1.bf16.msra.mxu0 0
  %121 = vmatprep.subr.bf16.mxu0 0
  %122 = vmatpush1.bf16.msra.mxu0 0
  %123 = vmatprep.subr.bf16.mxu0 0
  %124 = vmatpush1.bf16.msra.mxu0 0
  %125 = vmatprep.subr.bf16.mxu0 %v92
  %126 = vmatpush1.bf16.msra.mxu0 %v91
  %127 = vmatprep.subr.bf16.mxu0 %v89
  %128 = vmatpush1.bf16.msra.mxu0 %v88
  %129 = vmatprep.subr.bf16.mxu0 0
  %130 = vmatpush2.bf16.msra.mxu0 0
  %131 = vmatprep.subr.bf16.mxu0 0
  %132 = vmatpush2.bf16.msra.mxu0 0
  %133 = vmatprep.subr.bf16.mxu0 0
  %134 = vmatpush2.bf16.msra.mxu0 0
  %135 = vmatprep.subr.bf16.mxu0 0
  %136 = vmatpush2.bf16.msra.mxu0 0
  %137 = vmatprep.subr.bf16.mxu0 0
  %138 = vmatpush2.bf16.msra.mxu0 0
  %139 = vmatprep.subr.bf16.mxu0 0
  %140 = vmatpush2.bf16.msra.mxu0 0
  %141 = vmatprep.subr.bf16.mxu0 0
  %142 = vmatpush2.bf16.msra.mxu0 0
  %143 = vmatprep.subr.bf16.mxu0 0
  %144 = vmatpush2.bf16.msra.mxu0 0
  %145 = vmatprep.mubr.bf16.mxu0 0
  %146 = vmatmul.mubr.bf16.gmra.mxu0 %v102
  %v147 = vpop.f32.mrf.mxu0
  %v148 = vadd.f32 %v36, %v147
  %v149 = vpop.f32.mrf.mxu0
  %v150 = vadd.f32 %v40, %v149
  %v151 = vpop.f32.mrf.mxu0
  %v152 = vadd.f32 %v36, %v151
  %v153 = vpop.f32.mrf.mxu0
  %v154 = vadd.f32 %v40, %v153
  %155 = vmatprep.mubr.bf16.mxu0 0
  %156 = vmatmul.mubr.bf16.gmra.mxu0 %v105
  %v157 = vpop.f32.mrf.mxu0
  %v158 = vadd.f32 %v36, %v157
  %v159 = vpop.f32.mrf.mxu0
  %v160 = vadd.f32 %v40, %v159
  %v161 = vpop.f32.mrf.mxu0
  %v162 = vadd.f32 %v36, %v161
  %v163 = vpop.f32.mrf.mxu0
  %v164 = vadd.f32 %v40, %v163
  %165 = vmatprep.mubr.bf16.mxu0 0
  %166 = vmatmul.mubr.bf16.gmra.mxu0 %v108
  %v167 = vpop.f32.mrf.mxu0
  %v168 = vadd.f32 %v36, %v167
  %v169 = vpop.f32.mrf.mxu0
  %v170 = vadd.f32 %v40, %v169
  %v171 = vpop.f32.mrf.mxu0
  %v172 = vadd.f32 %v36, %v171
  %v173 = vpop.f32.mrf.mxu0
  %v174 = vadd.f32 %v40, %v173
  %175 = vmatprep.mubr.bf16.mxu0 0
  %176 = vmatmul.mubr.bf16.gmra.mxu0 %v111
  %v177 = vpop.f32.mrf.mxu0
  %v178 = vadd.f32 %v36, %v177
  %v179 = vpop.f32.mrf.mxu0
  %v180 = vadd.f32 %v40, %v179
  %v181 = vpop.f32.mrf.mxu0
  %v182 = vadd.f32 %v36, %v181
  %v183 = vpop.f32.mrf.mxu0
  %v184 = vadd.f32 %v40, %v183
  %185 = vdwg.mxu0
  %186 = vmatprep.subr.bf16.mxu0 0
  %187 = vmatpush1.bf16.msra.mxu0 0
  %188 = vmatprep.subr.bf16.mxu0 0
  %189 = vmatpush1.bf16.msra.mxu0 0
  %190 = vmatprep.subr.bf16.mxu0 0
  %191 = vmatpush1.bf16.msra.mxu0 0
  %192 = vmatprep.subr.bf16.mxu0 0
  %193 = vmatpush1.bf16.msra.mxu0 0
  %194 = vmatprep.subr.bf16.mxu0 0
  %195 = vmatpush1.bf16.msra.mxu0 0
  %196 = vmatprep.subr.bf16.mxu0 0
  %197 = vmatpush1.bf16.msra.mxu0 0
  %198 = vmatprep.subr.bf16.mxu0 0
  %199 = vmatpush1.bf16.msra.mxu0 %v93
  %200 = vmatprep.subr.bf16.mxu0 0
  %201 = vmatpush1.bf16.msra.mxu0 %v90
  %202 = vmatprep.subr.bf16.mxu0 0
  %203 = vmatpush2.bf16.msra.mxu0 0
  %204 = vmatprep.subr.bf16.mxu0 0
  %205 = vmatpush2.bf16.msra.mxu0 0
  %206 = vmatprep.subr.bf16.mxu0 0
  %207 = vmatpush2.bf16.msra.mxu0 0
  %208 = vmatprep.subr.bf16.mxu0 0
  %209 = vmatpush2.bf16.msra.mxu0 0
  %210 = vmatprep.subr.bf16.mxu0 0
  %211 = vmatpush2.bf16.msra.mxu0 0
  %212 = vmatprep.subr.bf16.mxu0 0
  %213 = vmatpush2.bf16.msra.mxu0 0
  %214 = vmatprep.subr.bf16.mxu0 0
  %215 = vmatpush2.bf16.msra.mxu0 0
  %216 = vmatprep.subr.bf16.mxu0 0
  %217 = vmatpush2.bf16.msra.mxu0 0
  %218 = vmatprep.mubr.bf16.mxu0 0
  %219 = vmatmul.mubr.bf16.gmra.mxu0 %v102
  %v220 = vpop.f32.mrf.mxu0
  %v221 = vadd.f32 %v44, %v220
  %v222 = vpop.f32.mrf.mxu0
  %v223 = vpop.f32.mrf.mxu0
  %v224 = vadd.f32 %v44, %v223
  %v225 = vpop.f32.mrf.mxu0
  %226 = vmatprep.mubr.bf16.mxu0 0
  %227 = vmatmul.mubr.bf16.gmra.mxu0 %v105
  %v228 = vpop.f32.mrf.mxu0
  %v229 = vadd.f32 %v44, %v228
  %v230 = vpop.f32.mrf.mxu0
  %v231 = vpop.f32.mrf.mxu0
  %v232 = vadd.f32 %v44, %v231
  %v233 = vpop.f32.mrf.mxu0
  %234 = vmatprep.mubr.bf16.mxu0 0
  %235 = vmatmul.mubr.bf16.gmra.mxu0 %v108
  %v236 = vpop.f32.mrf.mxu0
  %v237 = vadd.f32 %v44, %v236
  %v238 = vpop.f32.mrf.mxu0
  %v239 = vpop.f32.mrf.mxu0
  %v240 = vadd.f32 %v44, %v239
  %v241 = vpop.f32.mrf.mxu0
  %242 = vmatprep.mubr.bf16.mxu0 0
  %243 = vmatmul.mubr.bf16.gmra.mxu0 %v111
  %v244 = vpop.f32.mrf.mxu0
  %v245 = vadd.f32 %v44, %v244
  %v246 = vpop.f32.mrf.mxu0
  %v247 = vpop.f32.mrf.mxu0
  %v248 = vadd.f32 %v44, %v247
  %v249 = vpop.f32.mrf.mxu0
  %250 = vdwg.mxu0
  %251 = vst [vmem:[%s3] sm:$0xff] %v148
  %252 = vst [vmem:[%s3 + $0x8] sm:$0xff] %v150
  %253 = vst [vmem:[%s3 + $0x10] sm:$0xff] %v221
  %254 = vst [vmem:[%s3 + $0x18] sm:$0xff] %v152
  %255 = vst [vmem:[%s3 + $0x20] sm:$0xff] %v154
  %256 = vst [vmem:[%s3 + $0x28] sm:$0xff] %v224
  %257 = vst [vmem:[%s3 + $0x30] sm:$0xff] %v158
  %258 = vst [vmem:[%s3 + $0x38] sm:$0xff] %v160
  %259 = vst [vmem:[%s3 + $0x40] sm:$0xff] %v229
  %260 = vst [vmem:[%s3 + $0x48] sm:$0xff] %v162
  %261 = vst [vmem:[%s3 + $0x50] sm:$0xff] %v164
  %262 = vst [vmem:[%s3 + $0x58] sm:$0xff] %v232
  %263 = vst [vmem:[%s3 + $0x60] sm:$0xff] %v168
  %264 = vst [vmem:[%s3 + $0x68] sm:$0xff] %v170
  %265 = vst [vmem:[%s3 + $0x70] sm:$0xff] %v237
  %266 = vst [vmem:[%s3 + $0x78] sm:$0xff] %v172
  %267 = vst [vmem:[%s3 + $0x80] sm:$0xff] %v174
  %268 = vst [vmem:[%s3 + $0x88] sm:$0xff] %v240
  %269 = vst [vmem:[%s3 + $0x90] sm:$0xff] %v178
  %270 = vst [vmem:[%s3 + $0x98] sm:$0xff] %v180
  %271 = vst [vmem:[%s3 + $0xa0] sm:$0xff] %v245
  %272 = vst [vmem:[%s3 + $0xa8] sm:$0xff] %v182
  %273 = vst [vmem:[%s3 + $0xb0] sm:$0xff] %v184
  %274 = vst [vmem:[%s3 + $0xb8] sm:$0xff] %v248
  // Predicated region
  $region14: #{act_rnn_decoder_forward.3} parent=0 // pred_check
    _
  $region15: #{act_rnn_decoder_forward.3} parent=0 // pred_check_branch
    %276 = sbr.rel (0) target = $region17
  $region16: #{act_rnn_decoder_forward.3} parent=0 // pred_region
    _
  $region17: #{act_rnn_decoder_forward.3} parent=0 // pred_fallthru
    _
  // Predicated region
  $region18: #{act_rnn_decoder_forward.3} parent=0 // pred_check
    _
  $region19: #{act_rnn_decoder_forward.3} parent=0 // pred_check_branch
    %278 = sbr.rel (0) target = $region21
  $region20: #{act_rnn_decoder_forward.3} parent=0 // pred_region
    _
  $region21: #{act_rnn_decoder_forward.3} parent=0 // pred_fallthru
    _

// kernel: act_rnn_decoder_forward.4
$region0: #{act_rnn_decoder_forward.4}
  #allocation0 [shape = 'u32[]', space=smem, size = 0x4, offset = 0x4, fixed_abs, tag = 'smem constant byte address 0x4 - core index']
  #allocation1 [shape = 'u32[144,128]{1,0:T(1,128)}', space=vmem, size = 0x12000, scoped, tag = 'internal scratch']
  #allocation2 [shape = 'f32[8,128]{1,0:T(8,128)}', space=vmem, size = 0x1000, scoped, tag = 'scratch operand']
  %s0 = inlined_call_operand.vmem [shape: f32[8,8,384], index: 0, kind: input, shape index: {}]
  %s1 = inlined_call_operand.vmem [shape: f32[8,128], index: 1, kind: input, shape index: {}]
  %s2 = inlined_call_operand.vmem [shape: f32[128,384], index: 2, kind: input, shape index: {}]
  %s3 = inlined_call_operand.vmem [shape: f32[1,128], index: 3, kind: input, shape index: {}]
  %s4 = inlined_call_operand.vmem [shape: f32[8,8,128], index: 4, kind: output, shape index: {}]
  %s5 = sld [smem:[#allocation0]]
  $region30: #{act_rnn_decoder_forward.4} parent=0
    _
  %s7 = ssub.s32 1, %s5
  %s8 = scalar_select 0, %s7, %s5
  // Predicated region
  $region2: #{act_rnn_decoder_forward.4} parent=0 // pred_check
    _
  $region3: #{act_rnn_decoder_forward.4} parent=0 // pred_check_branch
    %10 = sbr.rel (0) target = $region5
  $region4: #{act_rnn_decoder_forward.4} parent=0 // pred_region
    _
  $region5: #{act_rnn_decoder_forward.4} parent=0 // pred_fallthru
    _
  // Predicated region
  $region6: #{act_rnn_decoder_forward.4} parent=0 // pred_check
    _
  $region7: #{act_rnn_decoder_forward.4} parent=0 // pred_check_branch
    %12 = sbr.rel (0) target = $region9
  $region8: #{act_rnn_decoder_forward.4} parent=0 // pred_region
    _
  $region9: #{act_rnn_decoder_forward.4} parent=0 // pred_fallthru
    _
  // Predicated region
  $region10: #{act_rnn_decoder_forward.4} parent=0 // pred_check
    _
  $region11: #{act_rnn_decoder_forward.4} parent=0 // pred_check_branch
    %14 = sbr.rel (0) target = $region13
  $region12: #{act_rnn_decoder_forward.4} parent=0 // pred_region
    _
  $region13: #{act_rnn_decoder_forward.4} parent=0 // pred_fallthru
    _
  // Predicated region
  $region14: #{act_rnn_decoder_forward.4} parent=0 // pred_check
    _
  $region15: #{act_rnn_decoder_forward.4} parent=0 // pred_check_branch
    %16 = sbr.rel (0) target = $region17
  $region16: #{act_rnn_decoder_forward.4} parent=0 // pred_region
    _
  $region17: #{act_rnn_decoder_forward.4} parent=0 // pred_fallthru
    _
  %p17 = scmp.eq.s32.totalorder 0, 0
  // Predicated region
  $region18: #{act_rnn_decoder_forward.4} parent=0 // pred_check
    %p18 = pneg %p17
  $region19: #{act_rnn_decoder_forward.4} parent=0 // pred_check_branch
    %20 = sbr.rel (%p18) target = $region21
  $region20: #{act_rnn_decoder_forward.4} parent=0 // pred_region
    %v21 = vld [vmem:[%s1] sm:$0xff]
    %22 = vst [vmem:[#allocation2] sm:$0xff] %v21
  $region21: #{act_rnn_decoder_forward.4} parent=0 // pred_fallthru
    _
  %v23 = vld [vmem:[%s2] sm:$0xff]
  %v24 = vld [vmem:[%s2 + $0x8] sm:$0xff]
  %v25 = vld [vmem:[%s2 + $0x10] sm:$0xff]
  %v26 = vld [vmem:[%s2 + $0x18] sm:$0xff]
  %v27 = vld [vmem:[%s2 + $0x20] sm:$0xff]
  %v28 = vld [vmem:[%s2 + $0x28] sm:$0xff]
  %v29 = vld [vmem:[%s2 + $0x30] sm:$0xff]
  %v30 = vld [vmem:[%s2 + $0x38] sm:$0xff]
  %v31 = vld [vmem:[%s2 + $0x40] sm:$0xff]
  %v32 = vld [vmem:[%s2 + $0x48] sm:$0xff]
  %v33 = vld [vmem:[%s2 + $0x50] sm:$0xff]
  %v34 = vld [vmem:[%s2 + $0x58] sm:$0xff]
  %v35 = vld [vmem:[%s2 + $0x60] sm:$0xff]
  %v36 = vld [vmem:[%s2 + $0x68] sm:$0xff]
  %v37 = vld [vmem:[%s2 + $0x70] sm:$0xff]
  %v38 = vld [vmem:[%s2 + $0x78] sm:$0xff]
  %v39 = vld [vmem:[%s2 + $0x80] sm:$0xff]
  %v40 = vld [vmem:[%s2 + $0x88] sm:$0xff]
  %v41 = vld [vmem:[%s2 + $0x90] sm:$0xff]
  %v42 = vld [vmem:[%s2 + $0x98] sm:$0xff]
  %v43 = vld [vmem:[%s2 + $0xa0] sm:$0xff]
  %v44 = vld [vmem:[%s2 + $0xa8] sm:$0xff]
  %v45 = vld [vmem:[%s2 + $0xb0] sm:$0xff]
  %v46 = vld [vmem:[%s2 + $0xb8] sm:$0xff]
  %v47 = vld [vmem:[%s2 + $0xc0] sm:$0xff]
  %v48 = vld [vmem:[%s2 + $0xc8] sm:$0xff]
  %v49 = vld [vmem:[%s2 + $0xd0] sm:$0xff]
  %v50 = vld [vmem:[%s2 + $0xd8] sm:$0xff]
  %v51 = vld [vmem:[%s2 + $0xe0] sm:$0xff]
  %v52 = vld [vmem:[%s2 + $0xe8] sm:$0xff]
  %v53 = vld [vmem:[%s2 + $0xf0] sm:$0xff]
  %v54 = vld [vmem:[%s2 + $0xf8] sm:$0xff]
  %v55 = vld [vmem:[%s2 + $0x100] sm:$0xff]
  %v56 = vld [vmem:[%s2 + $0x108] sm:$0xff]
  %v57 = vld [vmem:[%s2 + $0x110] sm:$0xff]
  %v58 = vld [vmem:[%s2 + $0x118] sm:$0xff]
  %v59 = vld [vmem:[%s2 + $0x120] sm:$0xff]
  %v60 = vld [vmem:[%s2 + $0x128] sm:$0xff]
  %v61 = vld [vmem:[%s2 + $0x130] sm:$0xff]
  %v62 = vld [vmem:[%s2 + $0x138] sm:$0xff]
  %v63 = vld [vmem:[%s2 + $0x140] sm:$0xff]
  %v64 = vld [vmem:[%s2 + $0x148] sm:$0xff]
  %v65 = vld [vmem:[%s2 + $0x150] sm:$0xff]
  %v66 = vld [vmem:[%s2 + $0x158] sm:$0xff]
  %v67 = vld [vmem:[%s2 + $0x160] sm:$0xff]
  %v68 = vld [vmem:[%s2 + $0x168] sm:$0xff]
  %v69 = vld [vmem:[%s2 + $0x170] sm:$0xff]
  %v70 = vld [vmem:[%s2 + $0x178] sm:$0xff]
  %v71 = vld [vmem:[%s3] sm:$0x1]
  %v72 = vld [vmem:[#allocation2] sm:$0xff]
  %v73 = vld [vmem:[%s0] sm:$0xff]
  %v74 = vld [vmem:[%s0 + $0x8] sm:$0xff]
  %v75 = vld [vmem:[%s0 + $0x10] sm:$0xff]
  %76 = vmatprep.subr.mxu0 %v69
  %77 = vmatpush1.msra.mxu0 %v68
  %78 = vmatprep.subr.mxu0 %v66
  %79 = vmatpush1.msra.mxu0 %v65
  %80 = vmatprep.subr.mxu0 %v63
  %81 = vmatpush1.msra.mxu0 %v62
  %82 = vmatprep.subr.mxu0 %v60
  %83 = vmatpush1.msra.mxu0 %v59
  %84 = vmatprep.subr.mxu0 %v57
  %85 = vmatpush1.msra.mxu0 %v56
  %86 = vmatprep.subr.mxu0 %v54
  %87 = vmatpush1.msra.mxu0 %v53
  %88 = vmatprep.subr.mxu0 %v51
  %89 = vmatpush1.msra.mxu0 %v50
  %90 = vmatprep.subr.mxu0 %v48
  %91 = vmatpush1.msra.mxu0 %v47
  %92 = vmatprep.subr.mxu0 %v45
  %93 = vmatpush1.msra.mxu0 %v44
  %94 = vmatprep.subr.mxu0 %v42
  %95 = vmatpush1.msra.mxu0 %v41
  %96 = vmatprep.subr.mxu0 %v39
  %97 = vmatpush1.msra.mxu0 %v38
  %98 = vmatprep.subr.mxu0 %v36
  %99 = vmatpush1.msra.mxu0 %v35
  %100 = vmatprep.subr.mxu0 %v33
  %101 = vmatpush1.msra.mxu0 %v32
  %102 = vmatprep.subr.mxu0 %v30
  %103 = vmatpush1.msra.mxu0 %v29
  %104 = vmatprep.subr.mxu0 %v27
  %105 = vmatpush1.msra.mxu0 %v26
  %106 = vmatprep.subr.mxu0 %v24
  %107 = vmatpush1.msra.mxu0 %v23
  %108 = vmatprep.subr.mxu0 0.0
  %109 = vmatpush2.msra.mxu0 0.0
  %110 = vmatprep.subr.mxu0 0.0
  %111 = vmatpush2.msra.mxu0 0.0
  %112 = vmatprep.subr.mxu0 0.0
  %113 = vmatpush2.msra.mxu0 0.0
  %114 = vmatprep.subr.mxu0 0.0
  %115 = vmatpush2.msra.mxu0 0.0
  %116 = vmatprep.subr.mxu0 0.0
  %117 = vmatpush2.msra.mxu0 0.0
  %118 = vmatprep.subr.mxu0 0.0
  %119 = vmatpush2.msra.mxu0 0.0
  %120 = vmatprep.subr.mxu0 0.0
  %121 = vmatpush2.msra.mxu0 0.0
  %122 = vmatprep.subr.mxu0 0.0
  %123 = vmatpush2.msra.mxu0 0.0
  %124 = vmatprep.subr.mxu0 0.0
  %125 = vmatpush2.msra.mxu0 0.0
  %126 = vmatprep.subr.mxu0 0.0
  %127 = vmatpush2.msra.mxu0 0.0
  %128 = vmatprep.subr.mxu0 0.0
  %129 = vmatpush2.msra.mxu0 0.0
  %130 = vmatprep.subr.mxu0 0.0
  %131 = vmatpush2.msra.mxu0 0.0
  %132 = vmatprep.subr.mxu0 0.0
  %133 = vmatpush2.msra.mxu0 0.0
  %134 = vmatprep.subr.mxu0 0.0
  %135 = vmatpush2.msra.mxu0 0.0
  %136 = vmatprep.subr.mxu0 0.0
  %137 = vmatpush2.msra.mxu0 0.0
  %138 = vmatprep.subr.mxu0 0.0
  %139 = vmatpush2.msra.mxu0 0.0
  %140 = vmatprep.mubr.f32.mxu0 0.0
  %141 = vmatmul.mubr.f32.gmra.mxu0 %v72
  %v142 = vpop.f32.mrf.mxu0
  %v143 = vadd.f32 0.0, %v142
  %v144 = vpop.f32.mrf.mxu0
  %v145 = vadd.f32 0.0, %v144
  %146 = vdwg.mxu0
  %147 = vmatprep.subr.mxu0 0.0
  %148 = vmatpush1.msra.mxu0 %v70
  %149 = vmatprep.subr.mxu0 0.0
  %150 = vmatpush1.msra.mxu0 %v67
  %151 = vmatprep.subr.mxu0 0.0
  %152 = vmatpush1.msra.mxu0 %v64
  %153 = vmatprep.subr.mxu0 0.0
  %154 = vmatpush1.msra.mxu0 %v61
  %155 = vmatprep.subr.mxu0 0.0
  %156 = vmatpush1.msra.mxu0 %v58
  %157 = vmatprep.subr.mxu0 0.0
  %158 = vmatpush1.msra.mxu0 %v55
  %159 = vmatprep.subr.mxu0 0.0
  %160 = vmatpush1.msra.mxu0 %v52
  %161 = vmatprep.subr.mxu0 0.0
  %162 = vmatpush1.msra.mxu0 %v49
  %163 = vmatprep.subr.mxu0 0.0
  %164 = vmatpush1.msra.mxu0 %v46
  %165 = vmatprep.subr.mxu0 0.0
  %166 = vmatpush1.msra.mxu0 %v43
  %167 = vmatprep.subr.mxu0 0.0
  %168 = vmatpush1.msra.mxu0 %v40
  %169 = vmatprep.subr.mxu0 0.0
  %170 = vmatpush1.msra.mxu0 %v37
  %171 = vmatprep.subr.mxu0 0.0
  %172 = vmatpush1.msra.mxu0 %v34
  %173 = vmatprep.subr.mxu0 0.0
  %174 = vmatpush1.msra.mxu0 %v31
  %175 = vmatprep.subr.mxu0 0.0
  %176 = vmatpush1.msra.mxu0 %v28
  %177 = vmatprep.subr.mxu0 0.0
  %178 = vmatpush1.msra.mxu0 %v25
  %179 = vmatprep.subr.mxu0 0.0
  %180 = vmatpush2.msra.mxu0 0.0
  %181 = vmatprep.subr.mxu0 0.0
  %182 = vmatpush2.msra.mxu0 0.0
  %183 = vmatprep.subr.mxu0 0.0
  %184 = vmatpush2.msra.mxu0 0.0
  %185 = vmatprep.subr.mxu0 0.0
  %186 = vmatpush2.msra.mxu0 0.0
  %187 = vmatprep.subr.mxu0 0.0
  %188 = vmatpush2.msra.mxu0 0.0
  %189 = vmatprep.subr.mxu0 0.0
  %190 = vmatpush2.msra.mxu0 0.0
  %191 = vmatprep.subr.mxu0 0.0
  %192 = vmatpush2.msra.mxu0 0.0
  %193 = vmatprep.subr.mxu0 0.0
  %194 = vmatpush2.msra.mxu0 0.0
  %195 = vmatprep.subr.mxu0 0.0
  %196 = vmatpush2.msra.mxu0 0.0
  %197 = vmatprep.subr.mxu0 0.0
  %198 = vmatpush2.msra.mxu0 0.0
  %199 = vmatprep.subr.mxu0 0.0
  %200 = vmatpush2.msra.mxu0 0.0
  %201 = vmatprep.subr.mxu0 0.0
  %202 = vmatpush2.msra.mxu0 0.0
  %203 = vmatprep.subr.mxu0 0.0
  %204 = vmatpush2.msra.mxu0 0.0
  %205 = vmatprep.subr.mxu0 0.0
  %206 = vmatpush2.msra.mxu0 0.0
  %207 = vmatprep.subr.mxu0 0.0
  %208 = vmatpush2.msra.mxu0 0.0
  %209 = vmatprep.subr.mxu0 0.0
  %210 = vmatpush2.msra.mxu0 0.0
  %211 = vmatprep.mubr.f32.mxu0 0.0
  %212 = vmatmul.mubr.f32.gmra.mxu0 %v72
  %v213 = vpop.f32.mrf.mxu0
  %v214 = vadd.f32 0.0, %v213
  %v215 = vpop.f32.mrf.mxu0
  %216 = vdwg.mxu0
  %v217 = vadd.f32 %v73, %v143
  %v218 = vxor.u32 %v217, 2147483648
  %v219 = vmul.f32 %v218, 1.442695
  %v220 = vpow.pop %v219
  %v221 = vadd.f32 %v220, 1.0
  %v222 = vrcp.pop %v221
  %v223 = vmul.f32 1.0, %v222
  %v224 = vadd.f32 %v74, %v145
  %v225 = vxor.u32 %v224, 2147483648
  %v226 = vmul.f32 %v225, 1.442695
  %v227 = vpow.pop %v226
  %v228 = vadd.f32 %v227, 1.0
  %v229 = vrcp.pop %v228
  %v230 = vmul.f32 1.0, %v229
  %v232 = vlaneseq
  %v233 = vshrl.u32 %v232, 7
  %v234 = vsub.s32 0, %v233
  %v235 = vrot.slane %v71, %v234
  %v237 = vadd.f32 %v214, %v235
  %v238 = vmul.f32 %v223, %v237
  %v239 = vadd.f32 %v75, %v238
  %v240 = vtanh.pop %v239
  %v241 = vsub.f32 1.0, %v230
  %v242 = vmul.f32 %v241, %v240
  %v243 = vmul.f32 %v230, %v72
  %v244 = vadd.f32 %v242, %v243
  %245 = vst [vmem:[%s4] sm:$0xff] %v244
  %s246 = scalar_lea.vmem %s0, 24
  %v247 = vld [vmem:[%s246] sm:$0xff]
  %v248 = vld [vmem:[%s246 + $0x8] sm:$0xff]
  %v249 = vld [vmem:[%s246 + $0x10] sm:$0xff]
  %250 = vmatprep.subr.mxu0 %v69
  %251 = vmatpush1.msra.mxu0 %v68
  %252 = vmatprep.subr.mxu0 %v66
  %253 = vmatpush1.msra.mxu0 %v65
  %254 = vmatprep.subr.mxu0 %v63
  %255 = vmatpush1.msra.mxu0 %v62
  %256 = vmatprep.subr.mxu0 %v60
  %257 = vmatpush1.msra.mxu0 %v59
  %258 = vmatprep.subr.mxu0 %v57
  %259 = vmatpush1.msra.mxu0 %v56
  %260 = vmatprep.subr.mxu0 %v54
  %261 = vmatpush1.msra.mxu0 %v53
  %262 = vmatprep.subr.mxu0 %v51
  %263 = vmatpush1.msra.mxu0 %v50
  %264 = vmatprep.subr.mxu0 %v48
  %265 = vmatpush1.msra.mxu0 %v47
  %266 = vmatprep.subr.mxu0 %v45
  %267 = vmatpush1.msra.mxu0 %v44
  %268 = vmatprep.subr.mxu0 %v42
  %269 = vmatpush1.msra.mxu0 %v41
  %270 = vmatprep.subr.mxu0 %v39
  %271 = vmatpush1.msra.mxu0 %v38
  %272 = vmatprep.subr.mxu0 %v36
  %273 = vmatpush1.msra.mxu0 %v35
  %274 = vmatprep.subr.mxu0 %v33
  %275 = vmatpush1.msra.mxu0 %v32
  %276 = vmatprep.subr.mxu0 %v30
  %277 = vmatpush1.msra.mxu0 %v29
  %278 = vmatprep.subr.mxu0 %v27
  %279 = vmatpush1.msra.mxu0 %v26
  %280 = vmatprep.subr.mxu0 %v24
  %281 = vmatpush1.msra.mxu0 %v23
  %282 = vmatprep.subr.mxu0 0.0
  %283 = vmatpush2.msra.mxu0 0.0
  %284 = vmatprep.subr.mxu0 0.0
  %285 = vmatpush2.msra.mxu0 0.0
  %286 = vmatprep.subr.mxu0 0.0
  %287 = vmatpush2.msra.mxu0 0.0
  %288 = vmatprep.subr.mxu0 0.0
  %289 = vmatpush2.msra.mxu0 0.0
  %290 = vmatprep.subr.mxu0 0.0
  %291 = vmatpush2.msra.mxu0 0.0
  %292 = vmatprep.subr.mxu0 0.0
  %293 = vmatpush2.msra.mxu0 0.0
  %294 = vmatprep.subr.mxu0 0.0
  %295 = vmatpush2.msra.mxu0 0.0
  %296 = vmatprep.subr.mxu0 0.0
  %297 = vmatpush2.msra.mxu0 0.0
  %298 = vmatprep.subr.mxu0 0.0
  %299 = vmatpush2.msra.mxu0 0.0
  %300 = vmatprep.subr.mxu0 0.0
  %301 = vmatpush2.msra.mxu0 0.0
  %302 = vmatprep.subr.mxu0 0.0
  %303 = vmatpush2.msra.mxu0 0.0
  %304 = vmatprep.subr.mxu0 0.0
  %305 = vmatpush2.msra.mxu0 0.0
  %306 = vmatprep.subr.mxu0 0.0
  %307 = vmatpush2.msra.mxu0 0.0
  %308 = vmatprep.subr.mxu0 0.0
  %309 = vmatpush2.msra.mxu0 0.0
  %310 = vmatprep.subr.mxu0 0.0
  %311 = vmatpush2.msra.mxu0 0.0
  %312 = vmatprep.subr.mxu0 0.0
  %313 = vmatpush2.msra.mxu0 0.0
  %314 = vmatprep.mubr.f32.mxu0 0.0
  %315 = vmatmul.mubr.f32.gmra.mxu0 %v244
  %v316 = vpop.f32.mrf.mxu0
  %v317 = vadd.f32 0.0, %v316
  %v318 = vpop.f32.mrf.mxu0
  %v319 = vadd.f32 0.0, %v318
  %320 = vdwg.mxu0
  %321 = vmatprep.subr.mxu0 0.0
  %322 = vmatpush1.msra.mxu0 %v70
  %323 = vmatprep.subr.mxu0 0.0
  %324 = vmatpush1.msra.mxu0 %v67
  %325 = vmatprep.subr.mxu0 0.0
  %326 = vmatpush1.msra.mxu0 %v64
  %327 = vmatprep.subr.mxu0 0.0
  %328 = vmatpush1.msra.mxu0 %v61
  %329 = vmatprep.subr.mxu0 0.0
  %330 = vmatpush1.msra.mxu0 %v58
  %331 = vmatprep.subr.mxu0 0.0
  %332 = vmatpush1.msra.mxu0 %v55
  %333 = vmatprep.subr.mxu0 0.0
  %334 = vmatpush1.msra.mxu0 %v52
  %335 = vmatprep.subr.mxu0 0.0
  %336 = vmatpush1.msra.mxu0 %v49
  %337 = vmatprep.subr.mxu0 0.0
  %338 = vmatpush1.msra.mxu0 %v46
  %339 = vmatprep.subr.mxu0 0.0
  %340 = vmatpush1.msra.mxu0 %v43
  %341 = vmatprep.subr.mxu0 0.0
  %342 = vmatpush1.msra.mxu0 %v40
  %343 = vmatprep.subr.mxu0 0.0
  %344 = vmatpush1.msra.mxu0 %v37
  %345 = vmatprep.subr.mxu0 0.0
  %346 = vmatpush1.msra.mxu0 %v34
  %347 = vmatprep.subr.mxu0 0.0
  %348 = vmatpush1.msra.mxu0 %v31
  %349 = vmatprep.subr.mxu0 0.0
  %350 = vmatpush1.msra.mxu0 %v28
  %351 = vmatprep.subr.mxu0 0.0
  %352 = vmatpush1.msra.mxu0 %v25
  %353 = vmatprep.subr.mxu0 0.0
  %354 = vmatpush2.msra.mxu0 0.0
  %355 = vmatprep.subr.mxu0 0.0
  %356 = vmatpush2.msra.mxu0 0.0
  %357 = vmatprep.subr.mxu0 0.0
  %358 = vmatpush2.msra.mxu0 0.0
  %359 = vmatprep.subr.mxu0 0.0
  %360 = vmatpush2.msra.mxu0 0.0
  %361 = vmatprep.subr.mxu0 0.0
  %362 = vmatpush2.msra.mxu0 0.0
  %363 = vmatprep.subr.mxu0 0.0
  %364 = vmatpush2.msra.mxu0 0.0
  %365 = vmatprep.subr.mxu0 0.0
  %366 = vmatpush2.msra.mxu0 0.0
  %367 = vmatprep.subr.mxu0 0.0
  %368 = vmatpush2.msra.mxu0 0.0
  %369 = vmatprep.subr.mxu0 0.0
  %370 = vmatpush2.msra.mxu0 0.0
  %371 = vmatprep.subr.mxu0 0.0
  %372 = vmatpush2.msra.mxu0 0.0
  %373 = vmatprep.subr.mxu0 0.0
  %374 = vmatpush2.msra.mxu0 0.0
  %375 = vmatprep.subr.mxu0 0.0
  %376 = vmatpush2.msra.mxu0 0.0
  %377 = vmatprep.subr.mxu0 0.0
  %378 = vmatpush2.msra.mxu0 0.0
  %379 = vmatprep.subr.mxu0 0.0
  %380 = vmatpush2.msra.mxu0 0.0
  %381 = vmatprep.subr.mxu0 0.0
  %382 = vmatpush2.msra.mxu0 0.0
  %383 = vmatprep.subr.mxu0 0.0
  %384 = vmatpush2.msra.mxu0 0.0
  %385 = vmatprep.mubr.f32.mxu0 0.0
  %386 = vmatmul.mubr.f32.gmra.mxu0 %v244
  %v387 = vpop.f32.mrf.mxu0
  %v388 = vadd.f32 0.0, %v387
  %v389 = vpop.f32.mrf.mxu0
  %390 = vdwg.mxu0
  %v391 = vadd.f32 %v247, %v317
  %v392 = vxor.u32 %v391, 2147483648
  %v393 = vmul.f32 %v392, 1.442695
  %v394 = vpow.pop %v393
  %v395 = vadd.f32 %v394, 1.0
  %v396 = vrcp.pop %v395
  %v397 = vmul.f32 1.0, %v396
  %v398 = vadd.f32 %v248, %v319
  %v399 = vxor.u32 %v398, 2147483648
  %v400 = vmul.f32 %v399, 1.442695
  %v401 = vpow.pop %v400
  %v402 = vadd.f32 %v401, 1.0
  %v403 = vrcp.pop %v402
  %v404 = vmul.f32 1.0, %v403
  %v405 = vadd.f32 %v388, %v235
  %v406 = vmul.f32 %v397, %v405
  %v407 = vadd.f32 %v249, %v406
  %v408 = vtanh.pop %v407
  %v409 = vsub.f32 1.0, %v404
  %v410 = vmul.f32 %v409, %v408
  %v411 = vmul.f32 %v404, %v244
  %v412 = vadd.f32 %v410, %v411
  %s413 = scalar_lea.vmem %s4, 8
  %414 = vst [vmem:[%s413] sm:$0xff] %v412
  %s415 = scalar_lea.vmem %s0, 48
  %v416 = vld [vmem:[%s415] sm:$0xff]
  %v417 = vld [vmem:[%s415 + $0x8] sm:$0xff]
  %v418 = vld [vmem:[%s415 + $0x10] sm:$0xff]
  %419 = vmatprep.subr.mxu0 %v69
  %420 = vmatpush1.msra.mxu0 %v68
  %421 = vmatprep.subr.mxu0 %v66
  %422 = vmatpush1.msra.mxu0 %v65
  %423 = vmatprep.subr.mxu0 %v63
  %424 = vmatpush1.msra.mxu0 %v62
  %425 = vmatprep.subr.mxu0 %v60
  %426 = vmatpush1.msra.mxu0 %v59
  %427 = vmatprep.subr.mxu0 %v57
  %428 = vmatpush1.msra.mxu0 %v56
  %429 = vmatprep.subr.mxu0 %v54
  %430 = vmatpush1.msra.mxu0 %v53
  %431 = vmatprep.subr.mxu0 %v51
  %432 = vmatpush1.msra.mxu0 %v50
  %433 = vmatprep.subr.mxu0 %v48
  %434 = vmatpush1.msra.mxu0 %v47
  %435 = vmatprep.subr.mxu0 %v45
  %436 = vmatpush1.msra.mxu0 %v44
  %437 = vmatprep.subr.mxu0 %v42
  %438 = vmatpush1.msra.mxu0 %v41
  %439 = vmatprep.subr.mxu0 %v39
  %440 = vmatpush1.msra.mxu0 %v38
  %441 = vmatprep.subr.mxu0 %v36
  %442 = vmatpush1.msra.mxu0 %v35
  %443 = vmatprep.subr.mxu0 %v33
  %444 = vmatpush1.msra.mxu0 %v32
  %445 = vmatprep.subr.mxu0 %v30
  %446 = vmatpush1.msra.mxu0 %v29
  %447 = vmatprep.subr.mxu0 %v27
  %448 = vmatpush1.msra.mxu0 %v26
  %449 = vmatprep.subr.mxu0 %v24
  %450 = vmatpush1.msra.mxu0 %v23
  %451 = vmatprep.subr.mxu0 0.0
  %452 = vmatpush2.msra.mxu0 0.0
  %453 = vmatprep.subr.mxu0 0.0
  %454 = vmatpush2.msra.mxu0 0.0
  %455 = vmatprep.subr.mxu0 0.0
  %456 = vmatpush2.msra.mxu0 0.0
  %457 = vmatprep.subr.mxu0 0.0
  %458 = vmatpush2.msra.mxu0 0.0
  %459 = vmatprep.subr.mxu0 0.0
  %460 = vmatpush2.msra.mxu0 0.0
  %461 = vmatprep.subr.mxu0 0.0
  %462 = vmatpush2.msra.mxu0 0.0
  %463 = vmatprep.subr.mxu0 0.0
  %464 = vmatpush2.msra.mxu0 0.0
  %465 = vmatprep.subr.mxu0 0.0
  %466 = vmatpush2.msra.mxu0 0.0
  %467 = vmatprep.subr.mxu0 0.0
  %468 = vmatpush2.msra.mxu0 0.0
  %469 = vmatprep.subr.mxu0 0.0
  %470 = vmatpush2.msra.mxu0 0.0
  %471 = vmatprep.subr.mxu0 0.0
  %472 = vmatpush2.msra.mxu0 0.0
  %473 = vmatprep.subr.mxu0 0.0
  %474 = vmatpush2.msra.mxu0 0.0
  %475 = vmatprep.subr.mxu0 0.0
  %476 = vmatpush2.msra.mxu0 0.0
  %477 = vmatprep.subr.mxu0 0.0
  %478 = vmatpush2.msra.mxu0 0.0
  %479 = vmatprep.subr.mxu0 0.0
  %480 = vmatpush2.msra.mxu0 0.0
  %481 = vmatprep.subr.mxu0 0.0
  %482 = vmatpush2.msra.mxu0 0.0
  %483 = vmatprep.mubr.f32.mxu0 0.0
  %484 = vmatmul.mubr.f32.gmra.mxu0 %v412
  %v485 = vpop.f32.mrf.mxu0
  %v486 = vadd.f32 0.0, %v485
  %v487 = vpop.f32.mrf.mxu0
  %v488 = vadd.f32 0.0, %v487
  %489 = vdwg.mxu0
  %490 = vmatprep.subr.mxu0 0.0
  %491 = vmatpush1.msra.mxu0 %v70
  %492 = vmatprep.subr.mxu0 0.0
  %493 = vmatpush1.msra.mxu0 %v67
  %494 = vmatprep.subr.mxu0 0.0
  %495 = vmatpush1.msra.mxu0 %v64
  %496 = vmatprep.subr.mxu0 0.0
  %497 = vmatpush1.msra.mxu0 %v61
  %498 = vmatprep.subr.mxu0 0.0
  %499 = vmatpush1.msra.mxu0 %v58
  %500 = vmatprep.subr.mxu0 0.0
  %501 = vmatpush1.msra.mxu0 %v55
  %502 = vmatprep.subr.mxu0 0.0
  %503 = vmatpush1.msra.mxu0 %v52
  %504 = vmatprep.subr.mxu0 0.0
  %505 = vmatpush1.msra.mxu0 %v49
  %506 = vmatprep.subr.mxu0 0.0
  %507 = vmatpush1.msra.mxu0 %v46
  %508 = vmatprep.subr.mxu0 0.0
  %509 = vmatpush1.msra.mxu0 %v43
  %510 = vmatprep.subr.mxu0 0.0
  %511 = vmatpush1.msra.mxu0 %v40
  %512 = vmatprep.subr.mxu0 0.0
  %513 = vmatpush1.msra.mxu0 %v37
  %514 = vmatprep.subr.mxu0 0.0
  %515 = vmatpush1.msra.mxu0 %v34
  %516 = vmatprep.subr.mxu0 0.0
  %517 = vmatpush1.msra.mxu0 %v31
  %518 = vmatprep.subr.mxu0 0.0
  %519 = vmatpush1.msra.mxu0 %v28
  %520 = vmatprep.subr.mxu0 0.0
  %521 = vmatpush1.msra.mxu0 %v25
  %522 = vmatprep.subr.mxu0 0.0
  %523 = vmatpush2.msra.mxu0 0.0
  %524 = vmatprep.subr.mxu0 0.0
  %525 = vmatpush2.msra.mxu0 0.0
  %526 = vmatprep.subr.mxu0 0.0
  %527 = vmatpush2.msra.mxu0 0.0
  %528 = vmatprep.subr.mxu0 0.0
  %529 = vmatpush2.msra.mxu0 0.0
  %530 = vmatprep.subr.mxu0 0.0
  %531 = vmatpush2.msra.mxu0 0.0
  %532 = vmatprep.subr.mxu0 0.0
  %533 = vmatpush2.msra.mxu0 0.0
  %534 = vmatprep.subr.mxu0 0.0
  %535 = vmatpush2.msra.mxu0 0.0
  %536 = vmatprep.subr.mxu0 0.0
  %537 = vmatpush2.msra.mxu0 0.0
  %538 = vmatprep.subr.mxu0 0.0
  %539 = vmatpush2.msra.mxu0 0.0
  %540 = vmatprep.subr.mxu0 0.0
  %541 = vmatpush2.msra.mxu0 0.0
  %542 = vmatprep.subr.mxu0 0.0
  %543 = vmatpush2.msra.mxu0 0.0
  %544 = vmatprep.subr.mxu0 0.0
  %545 = vmatpush2.msra.mxu0 0.0
  %546 = vmatprep.subr.mxu0 0.0
  %547 = vmatpush2.msra.mxu0 0.0
  %548 = vmatprep.subr.mxu0 0.0
  %549 = vmatpush2.msra.mxu0 0.0
  %550 = vmatprep.subr.mxu0 0.0
  %551 = vmatpush2.msra.mxu0 0.0
  %552 = vmatprep.subr.mxu0 0.0
  %553 = vmatpush2.msra.mxu0 0.0
  %554 = vmatprep.mubr.f32.mxu0 0.0
  %555 = vmatmul.mubr.f32.gmra.mxu0 %v412
  %v556 = vpop.f32.mrf.mxu0
  %v557 = vadd.f32 0.0, %v556
  %v558 = vpop.f32.mrf.mxu0
  %559 = vdwg.mxu0
  %v560 = vadd.f32 %v416, %v486
  %v561 = vxor.u32 %v560, 2147483648
  %v562 = vmul.f32 %v561, 1.442695
  %v563 = vpow.pop %v562
  %v564 = vadd.f32 %v563, 1.0
  %v565 = vrcp.pop %v564
  %v566 = vmul.f32 1.0, %v565
  %v567 = vadd.f32 %v417, %v488
  %v568 = vxor.u32 %v567, 2147483648
  %v569 = vmul.f32 %v568, 1.442695
  %v570 = vpow.pop %v569
  %v571 = vadd.f32 %v570, 1.0
  %v572 = vrcp.pop %v571
  %v573 = vmul.f32 1.0, %v572
  %v574 = vadd.f32 %v557, %v235
  %v575 = vmul.f32 %v566, %v574
  %v576 = vadd.f32 %v418, %v575
  %v577 = vtanh.pop %v576
  %v578 = vsub.f32 1.0, %v573
  %v579 = vmul.f32 %v578, %v577
  %v580 = vmul.f32 %v573, %v412
  %v581 = vadd.f32 %v579, %v580
  %s582 = scalar_lea.vmem %s4, 16
  %583 = vst [vmem:[%s582] sm:$0xff] %v581
  %s584 = scalar_lea.vmem %s0, 72
  %v585 = vld [vmem:[%s584] sm:$0xff]
  %v586 = vld [vmem:[%s584 + $0x8] sm:$0xff]
  %v587 = vld [vmem:[%s584 + $0x10] sm:$0xff]
  %588 = vmatprep.subr.mxu0 %v69
  %589 = vmatpush1.msra.mxu0 %v68
  %590 = vmatprep.subr.mxu0 %v66
  %591 = vmatpush1.msra.mxu0 %v65
  %592 = vmatprep.subr.mxu0 %v63
  %593 = vmatpush1.msra.mxu0 %v62
  %594 = vmatprep.subr.mxu0 %v60
  %595 = vmatpush1.msra.mxu0 %v59
  %596 = vmatprep.subr.mxu0 %v57
  %597 = vmatpush1.msra.mxu0 %v56
  %598 = vmatprep.subr.mxu0 %v54
  %599 = vmatpush1.msra.mxu0 %v53
  %600 = vmatprep.subr.mxu0 %v51
  %601 = vmatpush1.msra.mxu0 %v50
  %602 = vmatprep.subr.mxu0 %v48
  %603 = vmatpush1.msra.mxu0 %v47
  %604 = vmatprep.subr.mxu0 %v45
  %605 = vmatpush1.msra.mxu0 %v44
  %606 = vmatprep.subr.mxu0 %v42
  %607 = vmatpush1.msra.mxu0 %v41
  %608 = vmatprep.subr.mxu0 %v39
  %609 = vmatpush1.msra.mxu0 %v38
  %610 = vmatprep.subr.mxu0 %v36
  %611 = vmatpush1.msra.mxu0 %v35
  %612 = vmatprep.subr.mxu0 %v33
  %613 = vmatpush1.msra.mxu0 %v32
  %614 = vmatprep.subr.mxu0 %v30
  %615 = vmatpush1.msra.mxu0 %v29
  %616 = vmatprep.subr.mxu0 %v27
  %617 = vmatpush1.msra.mxu0 %v26
  %618 = vmatprep.subr.mxu0 %v24
  %619 = vmatpush1.msra.mxu0 %v23
  %620 = vmatprep.subr.mxu0 0.0
  %621 = vmatpush2.msra.mxu0 0.0
  %622 = vmatprep.subr.mxu0 0.0
  %623 = vmatpush2.msra.mxu0 0.0
  %624 = vmatprep.subr.mxu0 0.0
  %625 = vmatpush2.msra.mxu0 0.0
  %626 = vmatprep.subr.mxu0 0.0
  %627 = vmatpush2.msra.mxu0 0.0
  %628 = vmatprep.subr.mxu0 0.0
  %629 = vmatpush2.msra.mxu0 0.0
  %630 = vmatprep.subr.mxu0 0.0
  %631 = vmatpush2.msra.mxu0 0.0
  %632 = vmatprep.subr.mxu0 0.0
  %633 = vmatpush2.msra.mxu0 0.0
  %634 = vmatprep.subr.mxu0 0.0
  %635 = vmatpush2.msra.mxu0 0.0
  %636 = vmatprep.subr.mxu0 0.0
  %637 = vmatpush2.msra.mxu0 0.0
  %638 = vmatprep.subr.mxu0 0.0
  %639 = vmatpush2.msra.mxu0 0.0
  %640 = vmatprep.subr.mxu0 0.0
  %641 = vmatpush2.msra.mxu0 0.0
  %642 = vmatprep.subr.mxu0 0.0
  %643 = vmatpush2.msra.mxu0 0.0
  %644 = vmatprep.subr.mxu0 0.0
  %645 = vmatpush2.msra.mxu0 0.0
  %646 = vmatprep.subr.mxu0 0.0
  %647 = vmatpush2.msra.mxu0 0.0
  %648 = vmatprep.subr.mxu0 0.0
  %649 = vmatpush2.msra.mxu0 0.0
  %650 = vmatprep.subr.mxu0 0.0
  %651 = vmatpush2.msra.mxu0 0.0
  %652 = vmatprep.mubr.f32.mxu0 0.0
  %653 = vmatmul.mubr.f32.gmra.mxu0 %v581
  %v654 = vpop.f32.mrf.mxu0
  %v655 = vadd.f32 0.0, %v654
  %v656 = vpop.f32.mrf.mxu0
  %v657 = vadd.f32 0.0, %v656
  %658 = vdwg.mxu0
  %659 = vmatprep.subr.mxu0 0.0
  %660 = vmatpush1.msra.mxu0 %v70
  %661 = vmatprep.subr.mxu0 0.0
  %662 = vmatpush1.msra.mxu0 %v67
  %663 = vmatprep.subr.mxu0 0.0
  %664 = vmatpush1.msra.mxu0 %v64
  %665 = vmatprep.subr.mxu0 0.0
  %666 = vmatpush1.msra.mxu0 %v61
  %667 = vmatprep.subr.mxu0 0.0
  %668 = vmatpush1.msra.mxu0 %v58
  %669 = vmatprep.subr.mxu0 0.0
  %670 = vmatpush1.msra.mxu0 %v55
  %671 = vmatprep.subr.mxu0 0.0
  %672 = vmatpush1.msra.mxu0 %v52
  %673 = vmatprep.subr.mxu0 0.0
  %674 = vmatpush1.msra.mxu0 %v49
  %675 = vmatprep.subr.mxu0 0.0
  %676 = vmatpush1.msra.mxu0 %v46
  %677 = vmatprep.subr.mxu0 0.0
  %678 = vmatpush1.msra.mxu0 %v43
  %679 = vmatprep.subr.mxu0 0.0
  %680 = vmatpush1.msra.mxu0 %v40
  %681 = vmatprep.subr.mxu0 0.0
  %682 = vmatpush1.msra.mxu0 %v37
  %683 = vmatprep.subr.mxu0 0.0
  %684 = vmatpush1.msra.mxu0 %v34
  %685 = vmatprep.subr.mxu0 0.0
  %686 = vmatpush1.msra.mxu0 %v31
  %687 = vmatprep.subr.mxu0 0.0
  %688 = vmatpush1.msra.mxu0 %v28
  %689 = vmatprep.subr.mxu0 0.0
  %690 = vmatpush1.msra.mxu0 %v25
  %691 = vmatprep.subr.mxu0 0.0
  %692 = vmatpush2.msra.mxu0 0.0
  %693 = vmatprep.subr.mxu0 0.0
  %694 = vmatpush2.msra.mxu0 0.0
  %695 = vmatprep.subr.mxu0 0.0
  %696 = vmatpush2.msra.mxu0 0.0
  %697 = vmatprep.subr.mxu0 0.0
  %698 = vmatpush2.msra.mxu0 0.0
  %699 = vmatprep.subr.mxu0 0.0
  %700 = vmatpush2.msra.mxu0 0.0
  %701 = vmatprep.subr.mxu0 0.0
  %702 = vmatpush2.msra.mxu0 0.0
  %703 = vmatprep.subr.mxu0 0.0
  %704 = vmatpush2.msra.mxu0 0.0
  %705 = vmatprep.subr.mxu0 0.0
  %706 = vmatpush2.msra.mxu0 0.0
  %707 = vmatprep.subr.mxu0 0.0
  %708 = vmatpush2.msra.mxu0 0.0
  %709 = vmatprep.subr.mxu0 0.0
  %710 = vmatpush2.msra.mxu0 0.0
  %711 = vmatprep.subr.mxu0 0.0
  %712 = vmatpush2.msra.mxu0 0.0
  %713 = vmatprep.subr.mxu0 0.0
  %714 = vmatpush2.msra.mxu0 0.0
  %715 = vmatprep.subr.mxu0 0.0
  %716 = vmatpush2.msra.mxu0 0.0
  %717 = vmatprep.subr.mxu0 0.0
  %718 = vmatpush2.msra.mxu0 0.0
  %719 = vmatprep.subr.mxu0 0.0
  %720 = vmatpush2.msra.mxu0 0.0
  %721 = vmatprep.subr.mxu0 0.0
  %722 = vmatpush2.msra.mxu0 0.0
  %723 = vmatprep.mubr.f32.mxu0 0.0
  %724 = vmatmul.mubr.f32.gmra.mxu0 %v581
  %v725 = vpop.f32.mrf.mxu0
  %v726 = vadd.f32 0.0, %v725
  %v727 = vpop.f32.mrf.mxu0
  %728 = vdwg.mxu0
  %v729 = vadd.f32 %v585, %v655
  %v730 = vxor.u32 %v729, 2147483648
  %v731 = vmul.f32 %v730, 1.442695
  %v732 = vpow.pop %v731
  %v733 = vadd.f32 %v732, 1.0
  %v734 = vrcp.pop %v733
  %v735 = vmul.f32 1.0, %v734
  %v736 = vadd.f32 %v586, %v657
  %v737 = vxor.u32 %v736, 2147483648
  %v738 = vmul.f32 %v737, 1.442695
  %v739 = vpow.pop %v738
  %v740 = vadd.f32 %v739, 1.0
  %v741 = vrcp.pop %v740
  %v742 = vmul.f32 1.0, %v741
  %v743 = vadd.f32 %v726, %v235
  %v744 = vmul.f32 %v735, %v743
  %v745 = vadd.f32 %v587, %v744
  %v746 = vtanh.pop %v745
  %v747 = vsub.f32 1.0, %v742
  %v748 = vmul.f32 %v747, %v746
  %v749 = vmul.f32 %v742, %v581
  %v750 = vadd.f32 %v748, %v749
  %s751 = scalar_lea.vmem %s4, 24
  %752 = vst [vmem:[%s751] sm:$0xff] %v750
  %s753 = scalar_lea.vmem %s0, 96
  %v754 = vld [vmem:[%s753] sm:$0xff]
  %v755 = vld [vmem:[%s753 + $0x8] sm:$0xff]
  %v756 = vld [vmem:[%s753 + $0x10] sm:$0xff]
  %757 = vmatprep.subr.mxu0 %v69
  %758 = vmatpush1.msra.mxu0 %v68
  %759 = vmatprep.subr.mxu0 %v66
  %760 = vmatpush1.msra.mxu0 %v65
  %761 = vmatprep.subr.mxu0 %v63
  %762 = vmatpush1.msra.mxu0 %v62
  %763 = vmatprep.subr.mxu0 %v60
  %764 = vmatpush1.msra.mxu0 %v59
  %765 = vmatprep.subr.mxu0 %v57
  %766 = vmatpush1.msra.mxu0 %v56
  %767 = vmatprep.subr.mxu0 %v54
  %768 = vmatpush1.msra.mxu0 %v53
  %769 = vmatprep.subr.mxu0 %v51
  %770 = vmatpush1.msra.mxu0 %v50
  %771 = vmatprep.subr.mxu0 %v48
  %772 = vmatpush1.msra.mxu0 %v47
  %773 = vmatprep.subr.mxu0 %v45
  %774 = vmatpush1.msra.mxu0 %v44
  %775 = vmatprep.subr.mxu0 %v42
  %776 = vmatpush1.msra.mxu0 %v41
  %777 = vmatprep.subr.mxu0 %v39
  %778 = vmatpush1.msra.mxu0 %v38
  %779 = vmatprep.subr.mxu0 %v36
  %780 = vmatpush1.msra.mxu0 %v35
  %781 = vmatprep.subr.mxu0 %v33
  %782 = vmatpush1.msra.mxu0 %v32
  %783 = vmatprep.subr.mxu0 %v30
  %784 = vmatpush1.msra.mxu0 %v29
  %785 = vmatprep.subr.mxu0 %v27
  %786 = vmatpush1.msra.mxu0 %v26
  %787 = vmatprep.subr.mxu0 %v24
  %788 = vmatpush1.msra.mxu0 %v23
  %789 = vmatprep.subr.mxu0 0.0
  %790 = vmatpush2.msra.mxu0 0.0
  %791 = vmatprep.subr.mxu0 0.0
  %792 = vmatpush2.msra.mxu0 0.0
  %793 = vmatprep.subr.mxu0 0.0
  %794 = vmatpush2.msra.mxu0 0.0
  %795 = vmatprep.subr.mxu0 0.0
  %796 = vmatpush2.msra.mxu0 0.0
  %797 = vmatprep.subr.mxu0 0.0
  %798 = vmatpush2.msra.mxu0 0.0
  %799 = vmatprep.subr.mxu0 0.0
  %800 = vmatpush2.msra.mxu0 0.0
  %801 = vmatprep.subr.mxu0 0.0
  %802 = vmatpush2.msra.mxu0 0.0
  %803 = vmatprep.subr.mxu0 0.0
  %804 = vmatpush2.msra.mxu0 0.0
  %805 = vmatprep.subr.mxu0 0.0
  %806 = vmatpush2.msra.mxu0 0.0
  %807 = vmatprep.subr.mxu0 0.0
  %808 = vmatpush2.msra.mxu0 0.0
  %809 = vmatprep.subr.mxu0 0.0
  %810 = vmatpush2.msra.mxu0 0.0
  %811 = vmatprep.subr.mxu0 0.0
  %812 = vmatpush2.msra.mxu0 0.0
  %813 = vmatprep.subr.mxu0 0.0
  %814 = vmatpush2.msra.mxu0 0.0
  %815 = vmatprep.subr.mxu0 0.0
  %816 = vmatpush2.msra.mxu0 0.0
  %817 = vmatprep.subr.mxu0 0.0
  %818 = vmatpush2.msra.mxu0 0.0
  %819 = vmatprep.subr.mxu0 0.0
  %820 = vmatpush2.msra.mxu0 0.0
  %821 = vmatprep.mubr.f32.mxu0 0.0
  %822 = vmatmul.mubr.f32.gmra.mxu0 %v750
  %v823 = vpop.f32.mrf.mxu0
  %v824 = vadd.f32 0.0, %v823
  %v825 = vpop.f32.mrf.mxu0
  %v826 = vadd.f32 0.0, %v825
  %827 = vdwg.mxu0
  %828 = vmatprep.subr.mxu0 0.0
  %829 = vmatpush1.msra.mxu0 %v70
  %830 = vmatprep.subr.mxu0 0.0
  %831 = vmatpush1.msra.mxu0 %v67
  %832 = vmatprep.subr.mxu0 0.0
  %833 = vmatpush1.msra.mxu0 %v64
  %834 = vmatprep.subr.mxu0 0.0
  %835 = vmatpush1.msra.mxu0 %v61
  %836 = vmatprep.subr.mxu0 0.0
  %837 = vmatpush1.msra.mxu0 %v58
  %838 = vmatprep.subr.mxu0 0.0
  %839 = vmatpush1.msra.mxu0 %v55
  %840 = vmatprep.subr.mxu0 0.0
  %841 = vmatpush1.msra.mxu0 %v52
  %842 = vmatprep.subr.mxu0 0.0
  %843 = vmatpush1.msra.mxu0 %v49
  %844 = vmatprep.subr.mxu0 0.0
  %845 = vmatpush1.msra.mxu0 %v46
  %846 = vmatprep.subr.mxu0 0.0
  %847 = vmatpush1.msra.mxu0 %v43
  %848 = vmatprep.subr.mxu0 0.0
  %849 = vmatpush1.msra.mxu0 %v40
  %850 = vmatprep.subr.mxu0 0.0
  %851 = vmatpush1.msra.mxu0 %v37
  %852 = vmatprep.subr.mxu0 0.0
  %853 = vmatpush1.msra.mxu0 %v34
  %854 = vmatprep.subr.mxu0 0.0
  %855 = vmatpush1.msra.mxu0 %v31
  %856 = vmatprep.subr.mxu0 0.0
  %857 = vmatpush1.msra.mxu0 %v28
  %858 = vmatprep.subr.mxu0 0.0
  %859 = vmatpush1.msra.mxu0 %v25
  %860 = vmatprep.subr.mxu0 0.0
  %861 = vmatpush2.msra.mxu0 0.0
  %862 = vmatprep.subr.mxu0 0.0
  %863 = vmatpush2.msra.mxu0 0.0
  %864 = vmatprep.subr.mxu0 0.0
  %865 = vmatpush2.msra.mxu0 0.0
  %866 = vmatprep.subr.mxu0 0.0
  %867 = vmatpush2.msra.mxu0 0.0
  %868 = vmatprep.subr.mxu0 0.0
  %869 = vmatpush2.msra.mxu0 0.0
  %870 = vmatprep.subr.mxu0 0.0
  %871 = vmatpush2.msra.mxu0 0.0
  %872 = vmatprep.subr.mxu0 0.0
  %873 = vmatpush2.msra.mxu0 0.0
  %874 = vmatprep.subr.mxu0 0.0
  %875 = vmatpush2.msra.mxu0 0.0
  %876 = vmatprep.subr.mxu0 0.0
  %877 = vmatpush2.msra.mxu0 0.0
  %878 = vmatprep.subr.mxu0 0.0
  %879 = vmatpush2.msra.mxu0 0.0
  %880 = vmatprep.subr.mxu0 0.0
  %881 = vmatpush2.msra.mxu0 0.0
  %882 = vmatprep.subr.mxu0 0.0
  %883 = vmatpush2.msra.mxu0 0.0
  %884 = vmatprep.subr.mxu0 0.0
  %885 = vmatpush2.msra.mxu0 0.0
  %886 = vmatprep.subr.mxu0 0.0
  %887 = vmatpush2.msra.mxu0 0.0
  %888 = vmatprep.subr.mxu0 0.0
  %889 = vmatpush2.msra.mxu0 0.0
  %890 = vmatprep.subr.mxu0 0.0
  %891 = vmatpush2.msra.mxu0 0.0
  %892 = vmatprep.mubr.f32.mxu0 0.0
  %893 = vmatmul.mubr.f32.gmra.mxu0 %v750
  %v894 = vpop.f32.mrf.mxu0
  %v895 = vadd.f32 0.0, %v894
  %v896 = vpop.f32.mrf.mxu0
  %897 = vdwg.mxu0
  %v898 = vadd.f32 %v754, %v824
  %v899 = vxor.u32 %v898, 2147483648
  %v900 = vmul.f32 %v899, 1.442695
  %v901 = vpow.pop %v900
  %v902 = vadd.f32 %v901, 1.0
  %v903 = vrcp.pop %v902
  %v904 = vmul.f32 1.0, %v903
  %v905 = vadd.f32 %v755, %v826
  %v906 = vxor.u32 %v905, 2147483648
  %v907 = vmul.f32 %v906, 1.442695
  %v908 = vpow.pop %v907
  %v909 = vadd.f32 %v908, 1.0
  %v910 = vrcp.pop %v909
  %v911 = vmul.f32 1.0, %v910
  %v912 = vadd.f32 %v895, %v235
  %v913 = vmul.f32 %v904, %v912
  %v914 = vadd.f32 %v756, %v913
  %v915 = vtanh.pop %v914
  %v916 = vsub.f32 1.0, %v911
  %v917 = vmul.f32 %v916, %v915
  %v918 = vmul.f32 %v911, %v750
  %v919 = vadd.f32 %v917, %v918
  %s920 = scalar_lea.vmem %s4, 32
  %921 = vst [vmem:[%s920] sm:$0xff] %v919
  %s922 = scalar_lea.vmem %s0, 120
  %v923 = vld [vmem:[%s922] sm:$0xff]
  %v924 = vld [vmem:[%s922 + $0x8] sm:$0xff]
  %v925 = vld [vmem:[%s922 + $0x10] sm:$0xff]
  %926 = vmatprep.subr.mxu0 %v69
  %927 = vmatpush1.msra.mxu0 %v68
  %928 = vmatprep.subr.mxu0 %v66
  %929 = vmatpush1.msra.mxu0 %v65
  %930 = vmatprep.subr.mxu0 %v63
  %931 = vmatpush1.msra.mxu0 %v62
  %932 = vmatprep.subr.mxu0 %v60
  %933 = vmatpush1.msra.mxu0 %v59
  %934 = vmatprep.subr.mxu0 %v57
  %935 = vmatpush1.msra.mxu0 %v56
  %936 = vmatprep.subr.mxu0 %v54
  %937 = vmatpush1.msra.mxu0 %v53
  %938 = vmatprep.subr.mxu0 %v51
  %939 = vmatpush1.msra.mxu0 %v50
  %940 = vmatprep.subr.mxu0 %v48
  %941 = vmatpush1.msra.mxu0 %v47
  %942 = vmatprep.subr.mxu0 %v45
  %943 = vmatpush1.msra.mxu0 %v44
  %944 = vmatprep.subr.mxu0 %v42
  %945 = vmatpush1.msra.mxu0 %v41
  %946 = vmatprep.subr.mxu0 %v39
  %947 = vmatpush1.msra.mxu0 %v38
  %948 = vmatprep.subr.mxu0 %v36
  %949 = vmatpush1.msra.mxu0 %v35
  %950 = vmatprep.subr.mxu0 %v33
  %951 = vmatpush1.msra.mxu0 %v32
  %952 = vmatprep.subr.mxu0 %v30
  %953 = vmatpush1.msra.mxu0 %v29
  %954 = vmatprep.subr.mxu0 %v27
  %955 = vmatpush1.msra.mxu0 %v26
  %956 = vmatprep.subr.mxu0 %v24
  %957 = vmatpush1.msra.mxu0 %v23
  %958 = vmatprep.subr.mxu0 0.0
  %959 = vmatpush2.msra.mxu0 0.0
  %960 = vmatprep.subr.mxu0 0.0
  %961 = vmatpush2.msra.mxu0 0.0
  %962 = vmatprep.subr.mxu0 0.0
  %963 = vmatpush2.msra.mxu0 0.0
  %964 = vmatprep.subr.mxu0 0.0
  %965 = vmatpush2.msra.mxu0 0.0
  %966 = vmatprep.subr.mxu0 0.0
  %967 = vmatpush2.msra.mxu0 0.0
  %968 = vmatprep.subr.mxu0 0.0
  %969 = vmatpush2.msra.mxu0 0.0
  %970 = vmatprep.subr.mxu0 0.0
  %971 = vmatpush2.msra.mxu0 0.0
  %972 = vmatprep.subr.mxu0 0.0
  %973 = vmatpush2.msra.mxu0 0.0
  %974 = vmatprep.subr.mxu0 0.0
  %975 = vmatpush2.msra.mxu0 0.0
  %976 = vmatprep.subr.mxu0 0.0
  %977 = vmatpush2.msra.mxu0 0.0
  %978 = vmatprep.subr.mxu0 0.0
  %979 = vmatpush2.msra.mxu0 0.0
  %980 = vmatprep.subr.mxu0 0.0
  %981 = vmatpush2.msra.mxu0 0.0
  %982 = vmatprep.subr.mxu0 0.0
  %983 = vmatpush2.msra.mxu0 0.0
  %984 = vmatprep.subr.mxu0 0.0
  %985 = vmatpush2.msra.mxu0 0.0
  %986 = vmatprep.subr.mxu0 0.0
  %987 = vmatpush2.msra.mxu0 0.0
  %988 = vmatprep.subr.mxu0 0.0
  %989 = vmatpush2.msra.mxu0 0.0
  %990 = vmatprep.mubr.f32.mxu0 0.0
  %991 = vmatmul.mubr.f32.gmra.mxu0 %v919
  %v992 = vpop.f32.mrf.mxu0
  %v993 = vadd.f32 0.0, %v992
  %v994 = vpop.f32.mrf.mxu0
  %v995 = vadd.f32 0.0, %v994
  %996 = vdwg.mxu0
  %997 = vmatprep.subr.mxu0 0.0
  %998 = vmatpush1.msra.mxu0 %v70
  %999 = vmatprep.subr.mxu0 0.0
  %1000 = vmatpush1.msra.mxu0 %v67
  %1001 = vmatprep.subr.mxu0 0.0
  %1002 = vmatpush1.msra.mxu0 %v64
  %1003 = vmatprep.subr.mxu0 0.0
  %1004 = vmatpush1.msra.mxu0 %v61
  %1005 = vmatprep.subr.mxu0 0.0
  %1006 = vmatpush1.msra.mxu0 %v58
  %1007 = vmatprep.subr.mxu0 0.0
  %1008 = vmatpush1.msra.mxu0 %v55
  %1009 = vmatprep.subr.mxu0 0.0
  %1010 = vmatpush1.msra.mxu0 %v52
  %1011 = vmatprep.subr.mxu0 0.0
  %1012 = vmatpush1.msra.mxu0 %v49
  %1013 = vmatprep.subr.mxu0 0.0
  %1014 = vmatpush1.msra.mxu0 %v46
  %1015 = vmatprep.subr.mxu0 0.0
  %1016 = vmatpush1.msra.mxu0 %v43
  %1017 = vmatprep.subr.mxu0 0.0
  %1018 = vmatpush1.msra.mxu0 %v40
  %1019 = vmatprep.subr.mxu0 0.0
  %1020 = vmatpush1.msra.mxu0 %v37
  %1021 = vmatprep.subr.mxu0 0.0
  %1022 = vmatpush1.msra.mxu0 %v34
  %1023 = vmatprep.subr.mxu0 0.0
  %1024 = vmatpush1.msra.mxu0 %v31
  %1025 = vmatprep.subr.mxu0 0.0
  %1026 = vmatpush1.msra.mxu0 %v28
  %1027 = vmatprep.subr.mxu0 0.0
  %1028 = vmatpush1.msra.mxu0 %v25
  %1029 = vmatprep.subr.mxu0 0.0
  %1030 = vmatpush2.msra.mxu0 0.0
  %1031 = vmatprep.subr.mxu0 0.0
  %1032 = vmatpush2.msra.mxu0 0.0
  %1033 = vmatprep.subr.mxu0 0.0
  %1034 = vmatpush2.msra.mxu0 0.0
  %1035 = vmatprep.subr.mxu0 0.0
  %1036 = vmatpush2.msra.mxu0 0.0
  %1037 = vmatprep.subr.mxu0 0.0
  %1038 = vmatpush2.msra.mxu0 0.0
  %1039 = vmatprep.subr.mxu0 0.0
  %1040 = vmatpush2.msra.mxu0 0.0
  %1041 = vmatprep.subr.mxu0 0.0
  %1042 = vmatpush2.msra.mxu0 0.0
  %1043 = vmatprep.subr.mxu0 0.0
  %1044 = vmatpush2.msra.mxu0 0.0
  %1045 = vmatprep.subr.mxu0 0.0
  %1046 = vmatpush2.msra.mxu0 0.0
  %1047 = vmatprep.subr.mxu0 0.0
  %1048 = vmatpush2.msra.mxu0 0.0
  %1049 = vmatprep.subr.mxu0 0.0
  %1050 = vmatpush2.msra.mxu0 0.0
  %1051 = vmatprep.subr.mxu0 0.0
  %1052 = vmatpush2.msra.mxu0 0.0
  %1053 = vmatprep.subr.mxu0 0.0
  %1054 = vmatpush2.msra.mxu0 0.0
  %1055 = vmatprep.subr.mxu0 0.0
  %1056 = vmatpush2.msra.mxu0 0.0
  %1057 = vmatprep.subr.mxu0 0.0
  %1058 = vmatpush2.msra.mxu0 0.0
  %1059 = vmatprep.subr.mxu0 0.0
  %1060 = vmatpush2.msra.mxu0 0.0
  %1061 = vmatprep.mubr.f32.mxu0 0.0
  %1062 = vmatmul.mubr.f32.gmra.mxu0 %v919
  %v1063 = vpop.f32.mrf.mxu0
  %v1064 = vadd.f32 0.0, %v1063
  %v1065 = vpop.f32.mrf.mxu0
  %1066 = vdwg.mxu0
  %v1067 = vadd.f32 %v923, %v993
  %v1068 = vxor.u32 %v1067, 2147483648
  %v1069 = vmul.f32 %v1068, 1.442695
  %v1070 = vpow.pop %v1069
  %v1071 = vadd.f32 %v1070, 1.0
  %v1072 = vrcp.pop %v1071
  %v1073 = vmul.f32 1.0, %v1072
  %v1074 = vadd.f32 %v924, %v995
  %v1075 = vxor.u32 %v1074, 2147483648
  %v1076 = vmul.f32 %v1075, 1.442695
  %v1077 = vpow.pop %v1076
  %v1078 = vadd.f32 %v1077, 1.0
  %v1079 = vrcp.pop %v1078
  %v1080 = vmul.f32 1.0, %v1079
  %v1081 = vadd.f32 %v1064, %v235
  %v1082 = vmul.f32 %v1073, %v1081
  %v1083 = vadd.f32 %v925, %v1082
  %v1084 = vtanh.pop %v1083
  %v1085 = vsub.f32 1.0, %v1080
  %v1086 = vmul.f32 %v1085, %v1084
  %v1087 = vmul.f32 %v1080, %v919
  %v1088 = vadd.f32 %v1086, %v1087
  %s1089 = scalar_lea.vmem %s4, 40
  %1090 = vst [vmem:[%s1089] sm:$0xff] %v1088
  %s1091 = scalar_lea.vmem %s0, 144
  %v1092 = vld [vmem:[%s1091] sm:$0xff]
  %v1093 = vld [vmem:[%s1091 + $0x8] sm:$0xff]
  %v1094 = vld [vmem:[%s1091 + $0x10] sm:$0xff]
  %1095 = vmatprep.subr.mxu0 %v69
  %1096 = vmatpush1.msra.mxu0 %v68
  %1097 = vmatprep.subr.mxu0 %v66
  %1098 = vmatpush1.msra.mxu0 %v65
  %1099 = vmatprep.subr.mxu0 %v63
  %1100 = vmatpush1.msra.mxu0 %v62
  %1101 = vmatprep.subr.mxu0 %v60
  %1102 = vmatpush1.msra.mxu0 %v59
  %1103 = vmatprep.subr.mxu0 %v57
  %1104 = vmatpush1.msra.mxu0 %v56
  %1105 = vmatprep.subr.mxu0 %v54
  %1106 = vmatpush1.msra.mxu0 %v53
  %1107 = vmatprep.subr.mxu0 %v51
  %1108 = vmatpush1.msra.mxu0 %v50
  %1109 = vmatprep.subr.mxu0 %v48
  %1110 = vmatpush1.msra.mxu0 %v47
  %1111 = vmatprep.subr.mxu0 %v45
  %1112 = vmatpush1.msra.mxu0 %v44
  %1113 = vmatprep.subr.mxu0 %v42
  %1114 = vmatpush1.msra.mxu0 %v41
  %1115 = vmatprep.subr.mxu0 %v39
  %1116 = vmatpush1.msra.mxu0 %v38
  %1117 = vmatprep.subr.mxu0 %v36
  %1118 = vmatpush1.msra.mxu0 %v35
  %1119 = vmatprep.subr.mxu0 %v33
  %1120 = vmatpush1.msra.mxu0 %v32
  %1121 = vmatprep.subr.mxu0 %v30
  %1122 = vmatpush1.msra.mxu0 %v29
  %1123 = vmatprep.subr.mxu0 %v27
  %1124 = vmatpush1.msra.mxu0 %v26
  %1125 = vmatprep.subr.mxu0 %v24
  %1126 = vmatpush1.msra.mxu0 %v23
  %1127 = vmatprep.subr.mxu0 0.0
  %1128 = vmatpush2.msra.mxu0 0.0
  %1129 = vmatprep.subr.mxu0 0.0
  %1130 = vmatpush2.msra.mxu0 0.0
  %1131 = vmatprep.subr.mxu0 0.0
  %1132 = vmatpush2.msra.mxu0 0.0
  %1133 = vmatprep.subr.mxu0 0.0
  %1134 = vmatpush2.msra.mxu0 0.0
  %1135 = vmatprep.subr.mxu0 0.0
  %1136 = vmatpush2.msra.mxu0 0.0
  %1137 = vmatprep.subr.mxu0 0.0
  %1138 = vmatpush2.msra.mxu0 0.0
  %1139 = vmatprep.subr.mxu0 0.0
  %1140 = vmatpush2.msra.mxu0 0.0
  %1141 = vmatprep.subr.mxu0 0.0
  %1142 = vmatpush2.msra.mxu0 0.0
  %1143 = vmatprep.subr.mxu0 0.0
  %1144 = vmatpush2.msra.mxu0 0.0
  %1145 = vmatprep.subr.mxu0 0.0
  %1146 = vmatpush2.msra.mxu0 0.0
  %1147 = vmatprep.subr.mxu0 0.0
  %1148 = vmatpush2.msra.mxu0 0.0
  %1149 = vmatprep.subr.mxu0 0.0
  %1150 = vmatpush2.msra.mxu0 0.0
  %1151 = vmatprep.subr.mxu0 0.0
  %1152 = vmatpush2.msra.mxu0 0.0
  %1153 = vmatprep.subr.mxu0 0.0
  %1154 = vmatpush2.msra.mxu0 0.0
  %1155 = vmatprep.subr.mxu0 0.0
  %1156 = vmatpush2.msra.mxu0 0.0
  %1157 = vmatprep.subr.mxu0 0.0
  %1158 = vmatpush2.msra.mxu0 0.0
  %1159 = vmatprep.mubr.f32.mxu0 0.0
  %1160 = vmatmul.mubr.f32.gmra.mxu0 %v1088
  %v1161 = vpop.f32.mrf.mxu0
  %v1162 = vadd.f32 0.0, %v1161
  %v1163 = vpop.f32.mrf.mxu0
  %v1164 = vadd.f32 0.0, %v1163
  %1165 = vdwg.mxu0
  %1166 = vmatprep.subr.mxu0 0.0
  %1167 = vmatpush1.msra.mxu0 %v70
  %1168 = vmatprep.subr.mxu0 0.0
  %1169 = vmatpush1.msra.mxu0 %v67
  %1170 = vmatprep.subr.mxu0 0.0
  %1171 = vmatpush1.msra.mxu0 %v64
  %1172 = vmatprep.subr.mxu0 0.0
  %1173 = vmatpush1.msra.mxu0 %v61
  %1174 = vmatprep.subr.mxu0 0.0
  %1175 = vmatpush1.msra.mxu0 %v58
  %1176 = vmatprep.subr.mxu0 0.0
  %1177 = vmatpush1.msra.mxu0 %v55
  %1178 = vmatprep.subr.mxu0 0.0
  %1179 = vmatpush1.msra.mxu0 %v52
  %1180 = vmatprep.subr.mxu0 0.0
  %1181 = vmatpush1.msra.mxu0 %v49
  %1182 = vmatprep.subr.mxu0 0.0
  %1183 = vmatpush1.msra.mxu0 %v46
  %1184 = vmatprep.subr.mxu0 0.0
  %1185 = vmatpush1.msra.mxu0 %v43
  %1186 = vmatprep.subr.mxu0 0.0
  %1187 = vmatpush1.msra.mxu0 %v40
  %1188 = vmatprep.subr.mxu0 0.0
  %1189 = vmatpush1.msra.mxu0 %v37
  %1190 = vmatprep.subr.mxu0 0.0
  %1191 = vmatpush1.msra.mxu0 %v34
  %1192 = vmatprep.subr.mxu0 0.0
  %1193 = vmatpush1.msra.mxu0 %v31
  %1194 = vmatprep.subr.mxu0 0.0
  %1195 = vmatpush1.msra.mxu0 %v28
  %1196 = vmatprep.subr.mxu0 0.0
  %1197 = vmatpush1.msra.mxu0 %v25
  %1198 = vmatprep.subr.mxu0 0.0
  %1199 = vmatpush2.msra.mxu0 0.0
  %1200 = vmatprep.subr.mxu0 0.0
  %1201 = vmatpush2.msra.mxu0 0.0
  %1202 = vmatprep.subr.mxu0 0.0
  %1203 = vmatpush2.msra.mxu0 0.0
  %1204 = vmatprep.subr.mxu0 0.0
  %1205 = vmatpush2.msra.mxu0 0.0
  %1206 = vmatprep.subr.mxu0 0.0
  %1207 = vmatpush2.msra.mxu0 0.0
  %1208 = vmatprep.subr.mxu0 0.0
  %1209 = vmatpush2.msra.mxu0 0.0
  %1210 = vmatprep.subr.mxu0 0.0
  %1211 = vmatpush2.msra.mxu0 0.0
  %1212 = vmatprep.subr.mxu0 0.0
  %1213 = vmatpush2.msra.mxu0 0.0
  %1214 = vmatprep.subr.mxu0 0.0
  %1215 = vmatpush2.msra.mxu0 0.0
  %1216 = vmatprep.subr.mxu0 0.0
  %1217 = vmatpush2.msra.mxu0 0.0
  %1218 = vmatprep.subr.mxu0 0.0
  %1219 = vmatpush2.msra.mxu0 0.0
  %1220 = vmatprep.subr.mxu0 0.0
  %1221 = vmatpush2.msra.mxu0 0.0
  %1222 = vmatprep.subr.mxu0 0.0
  %1223 = vmatpush2.msra.mxu0 0.0
  %1224 = vmatprep.subr.mxu0 0.0
  %1225 = vmatpush2.msra.mxu0 0.0
  %1226 = vmatprep.subr.mxu0 0.0
  %1227 = vmatpush2.msra.mxu0 0.0
  %1228 = vmatprep.subr.mxu0 0.0
  %1229 = vmatpush2.msra.mxu0 0.0
  %1230 = vmatprep.mubr.f32.mxu0 0.0
  %1231 = vmatmul.mubr.f32.gmra.mxu0 %v1088
  %v1232 = vpop.f32.mrf.mxu0
  %v1233 = vadd.f32 0.0, %v1232
  %v1234 = vpop.f32.mrf.mxu0
  %1235 = vdwg.mxu0
  %v1236 = vadd.f32 %v1092, %v1162
  %v1237 = vxor.u32 %v1236, 2147483648
  %v1238 = vmul.f32 %v1237, 1.442695
  %v1239 = vpow.pop %v1238
  %v1240 = vadd.f32 %v1239, 1.0
  %v1241 = vrcp.pop %v1240
  %v1242 = vmul.f32 1.0, %v1241
  %v1243 = vadd.f32 %v1093, %v1164
  %v1244 = vxor.u32 %v1243, 2147483648
  %v1245 = vmul.f32 %v1244, 1.442695
  %v1246 = vpow.pop %v1245
  %v1247 = vadd.f32 %v1246, 1.0
  %v1248 = vrcp.pop %v1247
  %v1249 = vmul.f32 1.0, %v1248
  %v1250 = vadd.f32 %v1233, %v235
  %v1251 = vmul.f32 %v1242, %v1250
  %v1252 = vadd.f32 %v1094, %v1251
  %v1253 = vtanh.pop %v1252
  %v1254 = vsub.f32 1.0, %v1249
  %v1255 = vmul.f32 %v1254, %v1253
  %v1256 = vmul.f32 %v1249, %v1088
  %v1257 = vadd.f32 %v1255, %v1256
  %s1258 = scalar_lea.vmem %s4, 48
  %1259 = vst [vmem:[%s1258] sm:$0xff] %v1257
  %s1260 = scalar_lea.vmem %s0, 168
  %v1261 = vld [vmem:[%s1260] sm:$0xff]
  %v1262 = vld [vmem:[%s1260 + $0x8] sm:$0xff]
  %v1263 = vld [vmem:[%s1260 + $0x10] sm:$0xff]
  %1264 = vmatprep.subr.mxu0 %v69
  %1265 = vmatpush1.msra.mxu0 %v68
  %1266 = vmatprep.subr.mxu0 %v66
  %1267 = vmatpush1.msra.mxu0 %v65
  %1268 = vmatprep.subr.mxu0 %v63
  %1269 = vmatpush1.msra.mxu0 %v62
  %1270 = vmatprep.subr.mxu0 %v60
  %1271 = vmatpush1.msra.mxu0 %v59
  %1272 = vmatprep.subr.mxu0 %v57
  %1273 = vmatpush1.msra.mxu0 %v56
  %1274 = vmatprep.subr.mxu0 %v54
  %1275 = vmatpush1.msra.mxu0 %v53
  %1276 = vmatprep.subr.mxu0 %v51
  %1277 = vmatpush1.msra.mxu0 %v50
  %1278 = vmatprep.subr.mxu0 %v48
  %1279 = vmatpush1.msra.mxu0 %v47
  %1280 = vmatprep.subr.mxu0 %v45
  %1281 = vmatpush1.msra.mxu0 %v44
  %1282 = vmatprep.subr.mxu0 %v42
  %1283 = vmatpush1.msra.mxu0 %v41
  %1284 = vmatprep.subr.mxu0 %v39
  %1285 = vmatpush1.msra.mxu0 %v38
  %1286 = vmatprep.subr.mxu0 %v36
  %1287 = vmatpush1.msra.mxu0 %v35
  %1288 = vmatprep.subr.mxu0 %v33
  %1289 = vmatpush1.msra.mxu0 %v32
  %1290 = vmatprep.subr.mxu0 %v30
  %1291 = vmatpush1.msra.mxu0 %v29
  %1292 = vmatprep.subr.mxu0 %v27
  %1293 = vmatpush1.msra.mxu0 %v26
  %1294 = vmatprep.subr.mxu0 %v24
  %1295 = vmatpush1.msra.mxu0 %v23
  %1296 = vmatprep.subr.mxu0 0.0
  %1297 = vmatpush2.msra.mxu0 0.0
  %1298 = vmatprep.subr.mxu0 0.0
  %1299 = vmatpush2.msra.mxu0 0.0
  %1300 = vmatprep.subr.mxu0 0.0
  %1301 = vmatpush2.msra.mxu0 0.0
  %1302 = vmatprep.subr.mxu0 0.0
  %1303 = vmatpush2.msra.mxu0 0.0
  %1304 = vmatprep.subr.mxu0 0.0
  %1305 = vmatpush2.msra.mxu0 0.0
  %1306 = vmatprep.subr.mxu0 0.0
  %1307 = vmatpush2.msra.mxu0 0.0
  %1308 = vmatprep.subr.mxu0 0.0
  %1309 = vmatpush2.msra.mxu0 0.0
  %1310 = vmatprep.subr.mxu0 0.0
  %1311 = vmatpush2.msra.mxu0 0.0
  %1312 = vmatprep.subr.mxu0 0.0
  %1313 = vmatpush2.msra.mxu0 0.0
  %1314 = vmatprep.subr.mxu0 0.0
  %1315 = vmatpush2.msra.mxu0 0.0
  %1316 = vmatprep.subr.mxu0 0.0
  %1317 = vmatpush2.msra.mxu0 0.0
  %1318 = vmatprep.subr.mxu0 0.0
  %1319 = vmatpush2.msra.mxu0 0.0
  %1320 = vmatprep.subr.mxu0 0.0
  %1321 = vmatpush2.msra.mxu0 0.0
  %1322 = vmatprep.subr.mxu0 0.0
  %1323 = vmatpush2.msra.mxu0 0.0
  %1324 = vmatprep.subr.mxu0 0.0
  %1325 = vmatpush2.msra.mxu0 0.0
  %1326 = vmatprep.subr.mxu0 0.0
  %1327 = vmatpush2.msra.mxu0 0.0
  %1328 = vmatprep.mubr.f32.mxu0 0.0
  %1329 = vmatmul.mubr.f32.gmra.mxu0 %v1257
  %v1330 = vpop.f32.mrf.mxu0
  %v1331 = vadd.f32 0.0, %v1330
  %v1332 = vpop.f32.mrf.mxu0
  %v1333 = vadd.f32 0.0, %v1332
  %1334 = vdwg.mxu0
  %1335 = vmatprep.subr.mxu0 0.0
  %1336 = vmatpush1.msra.mxu0 %v70
  %1337 = vmatprep.subr.mxu0 0.0
  %1338 = vmatpush1.msra.mxu0 %v67
  %1339 = vmatprep.subr.mxu0 0.0
  %1340 = vmatpush1.msra.mxu0 %v64
  %1341 = vmatprep.subr.mxu0 0.0
  %1342 = vmatpush1.msra.mxu0 %v61
  %1343 = vmatprep.subr.mxu0 0.0
  %1344 = vmatpush1.msra.mxu0 %v58
  %1345 = vmatprep.subr.mxu0 0.0
  %1346 = vmatpush1.msra.mxu0 %v55
  %1347 = vmatprep.subr.mxu0 0.0
  %1348 = vmatpush1.msra.mxu0 %v52
  %1349 = vmatprep.subr.mxu0 0.0
  %1350 = vmatpush1.msra.mxu0 %v49
  %1351 = vmatprep.subr.mxu0 0.0
  %1352 = vmatpush1.msra.mxu0 %v46
  %1353 = vmatprep.subr.mxu0 0.0
  %1354 = vmatpush1.msra.mxu0 %v43
  %1355 = vmatprep.subr.mxu0 0.0
  %1356 = vmatpush1.msra.mxu0 %v40
  %1357 = vmatprep.subr.mxu0 0.0
  %1358 = vmatpush1.msra.mxu0 %v37
  %1359 = vmatprep.subr.mxu0 0.0
  %1360 = vmatpush1.msra.mxu0 %v34
  %1361 = vmatprep.subr.mxu0 0.0
  %1362 = vmatpush1.msra.mxu0 %v31
  %1363 = vmatprep.subr.mxu0 0.0
  %1364 = vmatpush1.msra.mxu0 %v28
  %1365 = vmatprep.subr.mxu0 0.0
  %1366 = vmatpush1.msra.mxu0 %v25
  %1367 = vmatprep.subr.mxu0 0.0
  %1368 = vmatpush2.msra.mxu0 0.0
  %1369 = vmatprep.subr.mxu0 0.0
  %1370 = vmatpush2.msra.mxu0 0.0
  %1371 = vmatprep.subr.mxu0 0.0
  %1372 = vmatpush2.msra.mxu0 0.0
  %1373 = vmatprep.subr.mxu0 0.0
  %1374 = vmatpush2.msra.mxu0 0.0
  %1375 = vmatprep.subr.mxu0 0.0
  %1376 = vmatpush2.msra.mxu0 0.0
  %1377 = vmatprep.subr.mxu0 0.0
  %1378 = vmatpush2.msra.mxu0 0.0
  %1379 = vmatprep.subr.mxu0 0.0
  %1380 = vmatpush2.msra.mxu0 0.0
  %1381 = vmatprep.subr.mxu0 0.0
  %1382 = vmatpush2.msra.mxu0 0.0
  %1383 = vmatprep.subr.mxu0 0.0
  %1384 = vmatpush2.msra.mxu0 0.0
  %1385 = vmatprep.subr.mxu0 0.0
  %1386 = vmatpush2.msra.mxu0 0.0
  %1387 = vmatprep.subr.mxu0 0.0
  %1388 = vmatpush2.msra.mxu0 0.0
  %1389 = vmatprep.subr.mxu0 0.0
  %1390 = vmatpush2.msra.mxu0 0.0
  %1391 = vmatprep.subr.mxu0 0.0
  %1392 = vmatpush2.msra.mxu0 0.0
  %1393 = vmatprep.subr.mxu0 0.0
  %1394 = vmatpush2.msra.mxu0 0.0
  %1395 = vmatprep.subr.mxu0 0.0
  %1396 = vmatpush2.msra.mxu0 0.0
  %1397 = vmatprep.subr.mxu0 0.0
  %1398 = vmatpush2.msra.mxu0 0.0
  %1399 = vmatprep.mubr.f32.mxu0 0.0
  %1400 = vmatmul.mubr.f32.gmra.mxu0 %v1257
  %v1401 = vpop.f32.mrf.mxu0
  %v1402 = vadd.f32 0.0, %v1401
  %v1403 = vpop.f32.mrf.mxu0
  %1404 = vdwg.mxu0
  %v1405 = vadd.f32 %v1261, %v1331
  %v1406 = vxor.u32 %v1405, 2147483648
  %v1407 = vmul.f32 %v1406, 1.442695
  %v1408 = vpow.pop %v1407
  %v1409 = vadd.f32 %v1408, 1.0
  %v1410 = vrcp.pop %v1409
  %v1411 = vmul.f32 1.0, %v1410
  %v1412 = vadd.f32 %v1262, %v1333
  %v1413 = vxor.u32 %v1412, 2147483648
  %v1414 = vmul.f32 %v1413, 1.442695
  %v1415 = vpow.pop %v1414
  %v1416 = vadd.f32 %v1415, 1.0
  %v1417 = vrcp.pop %v1416
  %v1418 = vmul.f32 1.0, %v1417
  %v1419 = vadd.f32 %v1402, %v235
  %v1420 = vmul.f32 %v1411, %v1419
  %v1421 = vadd.f32 %v1263, %v1420
  %v1422 = vtanh.pop %v1421
  %v1423 = vsub.f32 1.0, %v1418
  %v1424 = vmul.f32 %v1423, %v1422
  %v1425 = vmul.f32 %v1418, %v1257
  %v1426 = vadd.f32 %v1424, %v1425
  %s1427 = scalar_lea.vmem %s4, 56
  %1428 = vst [vmem:[%s1427] sm:$0xff] %v1426
  %1429 = vst [vmem:[#allocation2] sm:$0xff] %v1426
  // Predicated region
  $region22: #{act_rnn_decoder_forward.4} parent=0 // pred_check
    _
  $region23: #{act_rnn_decoder_forward.4} parent=0 // pred_check_branch
    %1431 = sbr.rel (0) target = $region25
  $region24: #{act_rnn_decoder_forward.4} parent=0 // pred_region
    _
  $region25: #{act_rnn_decoder_forward.4} parent=0 // pred_fallthru
    _
  // Predicated region
  $region26: #{act_rnn_decoder_forward.4} parent=0 // pred_check
    _
  $region27: #{act_rnn_decoder_forward.4} parent=0 // pred_check_branch
    %1433 = sbr.rel (0) target = $region29
  $region28: #{act_rnn_decoder_forward.4} parent=0 // pred_region
    _
  $region29: #{act_rnn_decoder_forward.4} parent=0 // pred_fallthru
    _

</llo_original>
